<compile_context>
chip_gen: v6e
topology: v6e:2x2x1
jax: 0.10.0
libtpu: 0.0.40
codegen_flags: <defaults>
</compile_context>

<pallas_src>
import math
import functools

import jax
import jax.numpy as jnp
from jax.experimental import pallas as pl
from jax.experimental.pallas import tpu as pltpu


def _round_up(a, m):
    return -(-a // m) * m


def _gelu_tanh(x):
    c = math.sqrt(2.0 / math.pi)
    return 0.5 * x * (1.0 + jnp.tanh(c * (x + 0.044715 * x * x * x)))


def _layernorm(z, g, b, eps=1e-5):
    mu = jnp.mean(z, axis=-1, keepdims=True)
    var = jnp.mean(jnp.square(z - mu), axis=-1, keepdims=True)
    return (z - mu) * jax.lax.rsqrt(var + eps) * g + b


# ---------------------------------------------------------------------------
# Hardware-aware knobs
# ---------------------------------------------------------------------------
@functools.lru_cache(maxsize=None)
def _vmem_limit():
    """Generation-aware VMEM budget."""
    try:
        cap = int(pltpu.get_tpu_info().vmem_capacity_bytes)
    except Exception:
        cap = 0
    if cap >= 120 * 1024 * 1024:        # v5e / v6e: 128 MiB physical
        return 100 * 1024 * 1024
    return 48 * 1024 * 1024             # v7x (64 MiB / TC) or unknown


@functools.lru_cache(maxsize=None)
def _single_buffer_ok():
    """Probe whether pipeline_mode=pl.Buffered(1) is supported (single-buffered
    resident weights); fall back silently if not."""
    try:
        def k(c_ref, x_ref, o_ref):
            o_ref[...] = x_ref[...] + c_ref[...]
        f = pl.pallas_call(
            k,
            out_shape=jax.ShapeDtypeStruct((16, 128), jnp.float32),
            grid_spec=pltpu.PrefetchScalarGridSpec(
                num_scalar_prefetch=0, grid=(2,),
                in_specs=[pl.BlockSpec((8, 128), lambda i: (0, 0),
                                       pipeline_mode=pl.Buffered(1)),
                          pl.BlockSpec((8, 128), lambda i: (i, 0))],
                out_specs=pl.BlockSpec((8, 128), lambda i: (i, 0))),
            compiler_params=pltpu.CompilerParams(
                dimension_semantics=("arbitrary",)))
        jax.block_until_ready(f(jnp.zeros((8, 128), jnp.float32),
                                jnp.zeros((16, 128), jnp.float32)))
        return True
    except Exception:
        return False


def _const_spec(shape):
    """Spec for a grid-invariant (weight) input."""
    nd = len(shape)
    idx = lambda *_: (0,) * nd
    if _single_buffer_ok():
        return pl.BlockSpec(shape, idx, pipeline_mode=pl.Buffered(1))
    return pl.BlockSpec(shape, idx)


def _compiler_params(dims):
    return pltpu.CompilerParams(dimension_semantics=dims,
                                vmem_limit_bytes=_vmem_limit())


def _pick_row_tile(R, target=512):
    for t in (target, 256, 128, 64, 32, 16, 8):
        if t <= R and R % t == 0:
            return t
    return min(_round_up(R, 8), target)


_N_TILE_TARGET = 256


def _pick_n_tile(N):
    if N <= 128 or N % 128 != 0:
        return N
    t = min(_N_TILE_TARGET, N)
    while N % t != 0:
        t -= 128
    return t


# ---------------------------------------------------------------------------
# Row-tiled kernels: embedding MLP and final LayerNorm+Linear
# ---------------------------------------------------------------------------
def _embed_kernel(x_ref, w1_ref, b1_ref, w2_ref, b2_ref, y_ref):
    bf16 = jnp.bfloat16
    h = jnp.dot(x_ref[...].astype(bf16), w1_ref[...],
                preferred_element_type=jnp.float32) + b1_ref[...]
    h = _gelu_tanh(h)
    y_ref[...] = jnp.dot(h.astype(bf16), w2_ref[...],
                         preferred_element_type=jnp.float32) + b2_ref[...]


def _final_kernel(x_ref, lnwb_ref, w_ref, b_ref, y_ref):
    lnwb = lnwb_ref[...]
    xn = _layernorm(x_ref[...], lnwb[0:1, :], lnwb[1:2, :])
    y_ref[...] = jnp.dot(xn.astype(jnp.bfloat16), w_ref[...],
                         preferred_element_type=jnp.float32) + b_ref[...]


def _rowwise_call(kernel, x2d, consts, out_dim):
    R, din = x2d.shape
    tr = _pick_row_tile(R)
    rp = _round_up(R, tr)
    if rp != R:
        x2d = jnp.pad(x2d, ((0, rp - R), (0, 0)))
    in_specs = [pl.BlockSpec((tr, din), lambda r: (r, 0))]
    in_specs += [_const_spec(c.shape) for c in consts]
    y = pl.pallas_call(
        kernel,
        out_shape=jax.ShapeDtypeStruct((rp, out_dim), jnp.float32),
        grid_spec=pltpu.PrefetchScalarGridSpec(
            num_scalar_prefetch=0,
            grid=(rp // tr,),
            in_specs=in_specs,
            out_specs=pl.BlockSpec((tr, out_dim), lambda r: (r, 0)),
        ),
        compiler_params=_compiler_params(("parallel",)),
    )(x2d, *consts)
    return y[:R] if rp != R else y


# ---------------------------------------------------------------------------
# Transformer Block: pass 1 (slice-attention, N-tiled accumulation)
# ---------------------------------------------------------------------------
def _block_attn_kernel(x_ref, a_ref, abias_ref, wv_ref, wqkv_ref, wmo_ref,
                       wout_ref, hmask_ref, vec_ref,
                       w_ref, ot2w_ref, pooled_acc, wsum_acc,
                       *, num_heads, num_slices, head_dim):
    NH, M, D = num_heads, num_slices, head_dim
    C = NH * D
    f32 = jnp.float32
    bf16 = jnp.bfloat16
    j = pl.program_id(1)
    last = pl.num_programs(1) - 1

    vec = vec_ref[...]                       # (12, C) packed vectors
    blk_ln1_w, blk_ln1_b = vec[0:1], vec[1:2]
    sa_ln1_w, sa_ln1_b = vec[2:3], vec[3:4]
    alpha_c = vec[4:5]
    mha_out_b = vec[5:6]
    sa_ln2_w, sa_ln2_b = vec[6:7], vec[7:8]
    bkv_v = vec[8:9]
    bq, bk, bv = vec[9:10], vec[10:11], vec[11:12]

    @pl.when(j == 0)
    def _():
        pooled_acc[...] = jnp.zeros_like(pooled_acc)
        wsum_acc[...] = jnp.zeros_like(wsum_acc)

    x = x_ref[0]                             # (tn, C) f32
    tn = x.shape[0]
    xa = _layernorm(x, blk_ln1_w, blk_ln1_b)
    xa16 = xa.astype(bf16)

    # slice scores with folded weights: (NH*M, tn)
    sc = jax.lax.dot_general(a_ref[...], xa16, (((1,), (1,)), ((), ())),
                             preferred_element_type=f32) + abias_ref[...]
    # softmax over the slice dim (M) within each head (per token)
    sc3 = sc.reshape(NH, M, tn)
    e = jnp.exp(sc3 - jnp.max(sc3, axis=1, keepdims=True))
    w3 = e * pl.reciprocal(jnp.sum(e, axis=1, keepdims=True), approx=True)
    w = w3.reshape(NH * M, tn)
    w_ref[0] = w                             # slice weights for pass 2

    # value projection (V half only) and pooled / wsum accumulation
    xv = jnp.dot(xa16, wv_ref[...], preferred_element_type=f32) + bkv_v
    pooled_acc[...] += jnp.dot(w.astype(bf16), xv.astype(bf16),
                               preferred_element_type=f32)
    wsum_acc[...] += jnp.sum(w, axis=1, keepdims=True)

    @pl.when(j == last)
    def _():
        hmask = hmask_ref[...]               # (NH, C)
        pooled = pooled_acc[...]
        tok = jnp.sum(pooled.reshape(NH, M, C) * hmask[:, None, :], axis=0)
        norm = jnp.sum(wsum_acc[...].reshape(NH, M, 1) * hmask[:, None, :],
                       axis=0)
        tok = tok / (norm + 1e-5)            # exact divide (review note)

        t1 = _layernorm(tok, sa_ln1_w, sa_ln1_b)          # (M, C)

        # MHA over the M slice tokens with block-diagonal K/V (no head loops)
        qkv = jnp.dot(t1.astype(bf16), wqkv_ref[...],
                      preferred_element_type=f32)
        q = qkv[:, :C] + bq
        k = qkv[:, C:2 * C] + bk
        v = qkv[:, 2 * C:] + bv
        k_bd = (k[None, :, :] * hmask[:, None, :]).reshape(NH * M, C)
        v_bd = (v[None, :, :] * hmask[:, None, :]).reshape(NH * M, C)
        scale = 1.0 / math.sqrt(D)
        dots = jax.lax.dot_general(k_bd.astype(bf16), q.astype(bf16),
                                   (((1,), (1,)), ((), ())),
                                   preferred_element_type=f32) * scale
        d3 = dots.reshape(NH, M, M)          # [head, key, query]
        de = jnp.exp(d3 - jnp.max(d3, axis=1, keepdims=True))
        attn = de / jnp.sum(de, axis=1, keepdims=True)
        attn_t = attn.reshape(NH * M, M)
        mha = jax.lax.dot_general(attn_t.astype(bf16), v_bd.astype(bf16),
                                  (((0,), (0,)), ((), ())),
                                  preferred_element_type=f32)      # (M, C)
        mha = jnp.dot(mha.astype(bf16), wmo_ref[...],
                      preferred_element_type=f32) + mha_out_b

        ot = t1 * alpha_c + mha
        ot2 = _layernorm(ot, sa_ln2_w, sa_ln2_b)
        # fold the output projection here (reassociated scatter-back)
        ot2_bd = (ot2[None, :, :] * hmask[:, None, :]).reshape(NH * M, C)
        ot2w_ref[0] = jnp.dot(ot2_bd.astype(bf16), wout_ref[...],
                              preferred_element_type=f32)


# ---------------------------------------------------------------------------
# Transformer Block: pass 2 (scatter-back + out-proj residual + MLP)
# ---------------------------------------------------------------------------
def _block_mlp_kernel(x_ref, w_ref, ot2w_ref, wfc1_ref, wfc2_ref,
                      fc1b_ref, vec_ref, y_ref):
    f32 = jnp.float32
    bf16 = jnp.bfloat16
    vec = vec_ref[...]                       # (4, C)
    out_b, ln2_w, ln2_b, fc2_b = vec[0:1], vec[1:2], vec[2:3], vec[3:4]

    w = w_ref[0]                             # (NH*M, tn)
    ot2w = ot2w_ref[0]                       # (NH*M, C)
    att = jax.lax.dot_general(w.astype(bf16), ot2w.astype(bf16),
                              (((0,), (0,)), ((), ())),
                              preferred_element_type=f32) + out_b  # (tn, C)
    x1 = x_ref[0] + att

    xm = _layernorm(x1, ln2_w, ln2_b)
    h = jnp.dot(xm.astype(bf16), wfc1_ref[...],
                preferred_element_type=f32) + fc1b_ref[...]
    h = _gelu_tanh(h)
    y_ref[0] = x1 + jnp.dot(h.astype(bf16), wfc2_ref[...],
                            preferred_element_type=f32) + fc2_b


# ---------------------------------------------------------------------------
# Host-side packing (weight folding, bf16 cast, packed vectors, head mask)
# ---------------------------------------------------------------------------
def _pack_block_params(bp, NH, M, D, dtype=jnp.bfloat16):
    C = NH * D
    eye = jnp.eye(NH, dtype=jnp.float32)
    # block-diagonal query: qbd[h*M+m, g*D+d] = wtq[h, m, d] * (h == g)
    qbd = jnp.einsum("hmd,hg->hmgd", bp["wtq"], eye).reshape(NH * M, C)
    wkv_k, wkv_v = bp["wkv"][:, :C], bp["wkv"][:, C:]
    bkv_k, bkv_v = bp["bkv"][:C], bp["bkv"][C:]
    # fold K-projection + head/slice mixing into a single weight (exact)
    a_mat = bp["mix"] @ (qbd @ wkv_k.T)                    # (NH*M, C)
    a_bias = (bp["mix"] @ (qbd @ bkv_k))[:, None]          # (NH*M, 1)

    h_idx = jnp.arange(NH, dtype=jnp.int32)[:, None]
    c_idx = jnp.arange(C, dtype=jnp.int32)[None, :]
    hmask = (c_idx // D == h_idx).astype(jnp.float32)      # (NH, C)

    bq, bk, bv = bp["bqkv"][:C], bp["bqkv"][C:2 * C], bp["bqkv"][2 * C:]
    vec_a = jnp.stack([bp["blk_ln1_w"], bp["blk_ln1_b"],
                       bp["sa_ln1_w"], bp["sa_ln1_b"],
                       bp["alphaC"], bp["bmo"],
                       bp["sa_ln2_w"], bp["sa_ln2_b"],
                       bkv_v, bq, bk, bv], axis=0)         # (12, C)
    vec_b = jnp.stack([bp["bout"], bp["blk_ln2_w"], bp["blk_ln2_b"],
                       bp["fc2_b"]], axis=0)               # (4, C)

    attn_mats = dict(
        A=a_mat.astype(dtype), a_bias=a_bias.astype(jnp.float32),
        wv=wkv_v.astype(dtype), wqkv=bp["wqkv"].astype(dtype),
        wmo=bp["wmo"].astype(dtype), wout=bp["wout"].astype(dtype),
        hmask=hmask, vecA=vec_a.astype(jnp.float32))
    mlp_mats = dict(
        wfc1=bp["fc1_w"].astype(dtype), wfc2=bp["fc2_w"].astype(dtype),
        fc1b=bp["fc1_b"][None, :].astype(jnp.float32),
        vecB=vec_b.astype(jnp.float32))
    return attn_mats, mlp_mats


def _run_block(x, attn_mats, mlp_mats, NH, M, D):
    B, N, C = x.shape
    NHM = NH * M
    tn = _pick_n_tile(N)
    nt = N // tn
    f32 = jnp.float32

    # ---------- pass 1: slice attention (accumulating over N tiles) ----------
    a_in = [attn_mats[k] for k in ("A", "a_bias", "wv", "wqkv", "wmo",
                                   "wout", "hmask", "vecA")]
    kern_a = functools.partial(_block_attn_kernel, num_heads=NH,
                               num_slices=M, head_dim=D)
    in_specs = [pl.BlockSpec((1, tn, C), lambda b, j: (b, j, 0))]
    in_specs += [_const_spec(m.shape) for m in a_in]
    w_full, ot2w = pl.pallas_call(
        kern_a,
        out_shape=(jax.ShapeDtypeStruct((B, NHM, N), f32),
                   jax.ShapeDtypeStruct((B, NHM, C), f32)),
        grid_spec=pltpu.PrefetchScalarGridSpec(
            num_scalar_prefetch=0,
            grid=(B, nt),
            in_specs=in_specs,
            out_specs=(pl.BlockSpec((1, NHM, tn), lambda b, j: (b, 0, j)),
                       pl.BlockSpec((1, NHM, C), lambda b, j: (b, 0, 0))),
            scratch_shapes=[pltpu.VMEM((NHM, C), f32),
                            pltpu.VMEM((NHM, 1), f32)]),
        compiler_params=_compiler_params(("parallel", "arbitrary")),
    )(x, *a_in)

    # ---------- pass 2: scatter-back + residual + MLP (fully parallel) -------
    m_in = [mlp_mats[k] for k in ("wfc1", "wfc2", "fc1b", "vecB")]
    in_specs = [pl.BlockSpec((1, tn, C), lambda b, j: (b, j, 0)),
                pl.BlockSpec((1, NHM, tn), lambda b, j: (b, 0, j)),
                pl.BlockSpec((1, NHM, C), lambda b, j: (b, 0, 0))]
    in_specs += [_const_spec(m.shape) for m in m_in]
    y = pl.pallas_call(
        _block_mlp_kernel,
        out_shape=jax.ShapeDtypeStruct((B, N, C), f32),
        grid_spec=pltpu.PrefetchScalarGridSpec(
            num_scalar_prefetch=0,
            grid=(B, nt),
            in_specs=in_specs,
            out_specs=pl.BlockSpec((1, tn, C), lambda b, j: (b, j, 0))),
        compiler_params=_compiler_params(("parallel", "parallel")),
    )(x, w_full, ot2w, *m_in)
    return y


# ---------------------------------------------------------------------------
# Full TS3Uncond forward (Pallas) and pure-JAX reference
# ---------------------------------------------------------------------------
def ts3_forward(x, params, cfg):
    B, N, in_dim = x.shape
    C, NH, M = cfg["hidden_dim"], cfg["num_heads"], cfg["num_slices"]
    D = C // NH
    dt = jnp.bfloat16

    # embedding MLP (row-tiled, resident bf16 weights, parallel grid)
    h = _rowwise_call(
        _embed_kernel, x.reshape(B * N, in_dim),
        [params["emb_w1"].astype(dt), params["emb_b1"][None, :],
         params["emb_w2"].astype(dt), params["emb_b2"][None, :]], C)
    h = h.reshape(B, N, C)

    # transformer blocks (two N-tiled fused passes per block)
    for bp in params["blocks"]:
        attn_mats, mlp_mats = _pack_block_params(bp, NH, M, D, dtype=dt)
        h = _run_block(h, attn_mats, mlp_mats, NH, M, D)

    # final LayerNorm + Linear with lane-dense (128-padded) output
    out_dim = params["fin_w"].shape[1]
    od_p = max(128, _round_up(out_dim, 128))
    fin_w = jnp.zeros((C, od_p), jnp.float32).at[:, :out_dim].set(params["fin_w"])
    fin_b = jnp.zeros((1, od_p), jnp.float32).at[0, :out_dim].set(params["fin_b"])
    lnwb = jnp.stack([params["fin_ln_w"], params["fin_ln_b"]], axis=0)
    out = _rowwise_call(_final_kernel, h.reshape(B * N, C),
                        [lnwb, fin_w.astype(dt), fin_b], od_p)
    return out[:, :out_dim].reshape(B, N, out_dim)


def reference_forward(x, params, cfg):
    C, NH, M = cfg["hidden_dim"], cfg["num_heads"], cfg["num_slices"]
    D = C // NH
    B, N, _ = x.shape

    def ln(z, g, b):
        mu = jnp.mean(z, -1, keepdims=True)
        var = jnp.mean(jnp.square(z - mu), -1, keepdims=True)
        return (z - mu) * jax.lax.rsqrt(var + 1e-5) * g + b

    h = _gelu_tanh(x @ params["emb_w1"] + params["emb_b1"])
    h = h @ params["emb_w2"] + params["emb_b2"]

    for bp in params["blocks"]:
        xa = ln(h, bp["blk_ln1_w"], bp["blk_ln1_b"])
        xkv = xa @ bp["wkv"] + bp["bkv"]
        xk = xkv[..., :C].reshape(B, N, NH, D).transpose(0, 2, 1, 3)
        xv = xkv[..., C:].reshape(B, N, NH, D).transpose(0, 2, 1, 3)
        sc = jnp.einsum("hmd,bhnd->bhmn", bp["wtq"], xk)
        sc = jnp.einsum("pq,bqn->bpn", bp["mix"],
                        sc.reshape(B, NH * M, N)).reshape(B, NH, M, N)
        w = jax.nn.softmax(sc, axis=-2)
        tok = jnp.einsum("bhmn,bhnd->bhmd", w, xv)
        tok = tok / (jnp.sum(w, axis=-1, keepdims=True) + 1e-05)
        tok = tok.transpose(0, 2, 1, 3).reshape(B, M, C)
        t1 = ln(tok, bp["sa_ln1_w"], bp["sa_ln1_b"])
        qkv = t1 @ bp["wqkv"] + bp["bqkv"]
        q, k, v = jnp.split(qkv, 3, axis=-1)
        hd = lambda z: z.reshape(B, M, NH, D).transpose(0, 2, 1, 3)
        q, k, v = hd(q), hd(k), hd(v)
        dots = jnp.einsum("bhqd,bhkd->bhqk", q, k) / math.sqrt(D)
        attn = jax.nn.softmax(dots, axis=-1)
        o = jnp.einsum("bhqk,bhkd->bhqd", attn, v)
        o = o.transpose(0, 2, 1, 3).reshape(B, M, C)
        mha = o @ bp["wmo"] + bp["bmo"]
        ot = t1 * bp["alphaC"] + mha
        ot2 = ln(ot, bp["sa_ln2_w"], bp["sa_ln2_b"])
        ot2h = ot2.reshape(B, M, NH, D).transpose(0, 2, 1, 3)
        out = jnp.einsum("bhmd,bhmn->bhnd", ot2h, w)
        out = out.transpose(0, 2, 1, 3).reshape(B, N, C)
        h1 = h + out @ bp["wout"] + bp["bout"]
        xm = ln(h1, bp["blk_ln2_w"], bp["blk_ln2_b"])
        mlp = _gelu_tanh(xm @ bp["fc1_w"] + bp["fc1_b"]) @ bp["fc2_w"] + bp["fc2_b"]
        h = h1 + mlp

    hn = ln(h, params["fin_ln_w"], params["fin_ln_b"])
    return hn @ params["fin_w"] + params["fin_b"]


# ---------------------------------------------------------------------------
# Deterministic parameter construction + self-check
# ---------------------------------------------------------------------------
def make_params(key, *, in_dim, out_dim, C, NH, M, L, mlp_ratio):
    D = C // NH
    CH = int(C * mlp_ratio)
    kit = iter(jax.random.split(key, 256))

    def wmat(shape):
        return 0.2 * jax.random.normal(next(kit), shape, jnp.float32)

    def bvec(shape):
        return 0.1 * jax.random.normal(next(kit), shape, jnp.float32)

    def lnv(shape):
        return 1.0 + 0.1 * jax.random.normal(next(kit), shape, jnp.float32)

    kmix = 1.0 / math.sqrt(NH * M)
    blocks = []
    for _ in range(L):
        blocks.append(dict(
            blk_ln1_w=lnv((C,)), blk_ln1_b=bvec((C,)),
            wkv=wmat((C, 2 * C)), bkv=bvec((2 * C,)),
            wtq=0.1 * jax.random.normal(next(kit), (NH, M, D), jnp.float32),
            mix=jax.random.uniform(next(kit), (NH * M, NH * M), jnp.float32,
                                   -kmix, kmix),
            sa_ln1_w=lnv((C,)), sa_ln1_b=bvec((C,)),
            alphaC=lnv((C,)),
            wqkv=wmat((C, 3 * C)), bqkv=bvec((3 * C,)),
            wmo=wmat((C, C)), bmo=bvec((C,)),
            sa_ln2_w=lnv((C,)), sa_ln2_b=bvec((C,)),
            wout=wmat((C, C)), bout=bvec((C,)),
            blk_ln2_w=lnv((C,)), blk_ln2_b=bvec((C,)),
            fc1_w=wmat((C, CH)), fc1_b=bvec((CH,)),
            fc2_w=wmat((CH, C)), fc2_b=bvec((C,)),
        ))
    return dict(
        emb_w1=wmat((in_dim, 2 * C)), emb_b1=bvec((2 * C,)),
        emb_w2=wmat((2 * C, C)), emb_b2=bvec((C,)),
        blocks=blocks,
        fin_ln_w=lnv((C,)), fin_ln_b=bvec((C,)),
        fin_w=wmat((C, out_dim)), fin_b=bvec((out_dim,)),
    )


if __name__ == "__main__":
    B, N = 2, 512
    in_dim, out_dim = 4, 4
    hidden, num_heads, num_slices = 32, 4, 8
    num_layers, mlp_ratio = 2, 2

    key = jax.random.PRNGKey(0)
    kp, kx = jax.random.split(key)
    params = make_params(kp, in_dim=in_dim, out_dim=out_dim, C=hidden,
                         NH=num_heads, M=num_slices, L=num_layers,
                         mlp_ratio=mlp_ratio)
    x = jax.random.normal(kx, (B, N, in_dim), jnp.float32)
    cfg = dict(hidden_dim=hidden, num_heads=num_heads, num_slices=num_slices)

    y = ts3_forward(x, params, cfg)
    y = jax.block_until_ready(y)

    y_ref = reference_forward(x, params, cfg)
    assert y.shape == (B, N, out_dim)
    err = float(jnp.max(jnp.abs(y - y_ref)))
    scale = float(jnp.max(jnp.abs(y_ref)))
    # bf16 MXU operands (f32 accumulation) -> tolerance relative to output scale
    if err > 5e-2 * max(1.0, scale):
        raise SystemExit("mismatch vs reference: max abs err = %g (scale %g)"
                         % (err, scale))
    print("KERNEL_OK")
</pallas_src>

<mosaic_0001>
module attributes {stable_mosaic.version = 11 : i64} {
  func.func @k(%arg0: i32, %arg1: memref<8x128xf32, #tpu.memory_space<vmem>>, %arg2: memref<8x128xf32, #tpu.memory_space<vmem>>, %arg3: memref<8x128xf32, #tpu.memory_space<vmem>>) attributes {dimension_semantics = [#tpu.dimension_semantics<arbitrary>], iteration_bounds = array<i64: 2>, scalar_prefetch = 0 : i64, scratch_operands = 0 : i64, tpu.core_type = #tpu.core_type<tc>, window_params = [{pipeline_mode = #tpu.pipeline_mode<synchronous>, transform_indices = @transform_0, window_bounds = array<i64: 8, 128>}, {transform_indices = @transform_1, window_bounds = array<i64: 8, 128>}, {transform_indices = @transform_2, window_bounds = array<i64: 8, 128>}]} {
    %c0 = arith.constant 0 : index
    %c0_0 = arith.constant 0 : index
    %0 = vector.load %arg2[%c0, %c0_0] : memref<8x128xf32, #tpu.memory_space<vmem>>, vector<8x128xf32>
    %c0_1 = arith.constant 0 : index
    %c0_2 = arith.constant 0 : index
    %1 = vector.load %arg1[%c0_1, %c0_2] : memref<8x128xf32, #tpu.memory_space<vmem>>, vector<8x128xf32>
    %2 = arith.addf %0, %1 : vector<8x128xf32>
    %c0_3 = arith.constant 0 : index
    %c0_4 = arith.constant 0 : index
    %3 = vector.load %arg3[%c0_3, %c0_4] : memref<8x128xf32, #tpu.memory_space<vmem>>, vector<8x128xf32>
    tpu.vector_store %arg3[%c0_3, %c0_4], %2 {strides = array<i32>} : memref<8x128xf32, #tpu.memory_space<vmem>>, vector<8x128xf32>,
    return
  }
  func.func @transform_0(%arg0: i32) -> (i32, i32) {
    %c0_i32 = arith.constant 0 : i32
    %c0_i32_0 = arith.constant 0 : i32
    %c0_i32_1 = arith.constant 0 : i32
    return %c0_i32, %c0_i32_0 : i32, i32
  }
  func.func @transform_1(%arg0: i32) -> (i32, i32) {
    %c0_i32 = arith.constant 0 : i32
    %c0_i32_0 = arith.constant 0 : i32
    return %arg0, %c0_i32 : i32, i32
  }
  func.func @transform_2(%arg0: i32) -> (i32, i32) {
    %c0_i32 = arith.constant 0 : i32
    %c0_i32_0 = arith.constant 0 : i32
    return %arg0, %c0_i32 : i32, i32
  }
}

module attributes {stable_mosaic.version = 11 : i64} {
  func.func @_embed_kernel(%arg0: i32, %arg1: memref<512x4xf32, #tpu.memory_space<vmem>>, %arg2: memref<4x64xbf16, #tpu.memory_space<vmem>>, %arg3: memref<1x64xf32, #tpu.memory_space<vmem>>, %arg4: memref<64x32xbf16, #tpu.memory_space<vmem>>, %arg5: memref<1x32xf32, #tpu.memory_space<vmem>>, %arg6: memref<512x32xf32, #tpu.memory_space<vmem>>) attributes {dimension_semantics = [#tpu.dimension_semantics<parallel>], iteration_bounds = array<i64: 2>, scalar_prefetch = 0 : i64, scratch_operands = 0 : i64, tpu.core_type = #tpu.core_type<tc>, window_params = [{transform_indices = @transform_0, window_bounds = array<i64: 512, 4>}, {pipeline_mode = #tpu.pipeline_mode<synchronous>, transform_indices = @transform_1, window_bounds = array<i64: 4, 64>}, {pipeline_mode = #tpu.pipeline_mode<synchronous>, transform_indices = @transform_2, window_bounds = array<i64: 1, 64>}, {pipeline_mode = #tpu.pipeline_mode<synchronous>, transform_indices = @transform_3, window_bounds = array<i64: 64, 32>}, {pipeline_mode = #tpu.pipeline_mode<synchronous>, transform_indices = @transform_4, window_bounds = array<i64: 1, 32>}, {transform_indices = @transform_5, window_bounds = array<i64: 512, 32>}]} {
    %c0 = arith.constant 0 : index
    %c0_0 = arith.constant 0 : index
    %0 = vector.load %arg1[%c0, %c0_0] : memref<512x4xf32, #tpu.memory_space<vmem>>, vector<512x4xf32>
    %1 = arith.truncf %0 : vector<512x4xf32> to vector<512x4xbf16>
    %c0_1 = arith.constant 0 : index
    %c0_2 = arith.constant 0 : index
    %2 = vector.load %arg2[%c0_1, %c0_2] : memref<4x64xbf16, #tpu.memory_space<vmem>>, vector<4x64xbf16>
    %cst = arith.constant dense<0.000000e+00> : vector<512x64xf32>
    %3 = tpu.matmul %1, %2, %cst {dimension_numbers = #tpu.dot_dimension_numbers<[1], [0], [0], [1], [0, 0, 1, 1], [], []>} : vector<512x4xbf16>, vector<4x64xbf16>, vector<512x64xf32> -> vector<512x64xf32>
    %c0_3 = arith.constant 0 : index
    %c0_4 = arith.constant 0 : index
    %4 = vector.load %arg3[%c0_3, %c0_4] : memref<1x64xf32, #tpu.memory_space<vmem>>, vector<1x64xf32>
    %5 = vector.broadcast %4 : vector<1x64xf32> to vector<512x64xf32>
    %6 = arith.addf %3, %5 : vector<512x64xf32>
    %cst_5 = arith.constant 5.000000e-01 : f32
    %7 = vector.broadcast %cst_5 : f32 to vector<512x64xf32>
    %8 = arith.mulf %7, %6 : vector<512x64xf32>
    %cst_6 = arith.constant 4.471500e-02 : f32
    %9 = vector.broadcast %cst_6 : f32 to vector<512x64xf32>
    %10 = arith.mulf %9, %6 : vector<512x64xf32>
    %11 = arith.mulf %10, %6 : vector<512x64xf32>
    %12 = arith.mulf %11, %6 : vector<512x64xf32>
    %13 = arith.addf %6, %12 : vector<512x64xf32>
    %cst_7 = arith.constant 0.797884583 : f32
    %14 = vector.broadcast %cst_7 : f32 to vector<512x64xf32>
    %15 = arith.mulf %14, %13 : vector<512x64xf32>
    %16 = math.tanh %15 : vector<512x64xf32>
    %cst_8 = arith.constant 1.000000e+00 : f32
    %17 = vector.broadcast %cst_8 : f32 to vector<512x64xf32>
    %18 = arith.addf %17, %16 : vector<512x64xf32>
    %19 = arith.mulf %8, %18 : vector<512x64xf32>
    %20 = arith.truncf %19 : vector<512x64xf32> to vector<512x64xbf16>
    %c0_9 = arith.constant 0 : index
    %c0_10 = arith.constant 0 : index
    %21 = vector.load %arg4[%c0_9, %c0_10] : memref<64x32xbf16, #tpu.memory_space<vmem>>, vector<64x32xbf16>
    %cst_11 = arith.constant dense<0.000000e+00> : vector<512x32xf32>
    %22 = tpu.matmul %20, %21, %cst_11 {dimension_numbers = #tpu.dot_dimension_numbers<[1], [0], [0], [1], [0, 0, 1, 1], [], []>} : vector<512x64xbf16>, vector<64x32xbf16>, vector<512x32xf32> -> vector<512x32xf32>
    %c0_12 = arith.constant 0 : index
    %c0_13 = arith.constant 0 : index
    %23 = vector.load %arg5[%c0_12, %c0_13] : memref<1x32xf32, #tpu.memory_space<vmem>>, vector<1x32xf32>
    %24 = vector.broadcast %23 : vector<1x32xf32> to vector<512x32xf32>
    %25 = arith.addf %22, %24 : vector<512x32xf32>
    %c0_14 = arith.constant 0 : index
    %c0_15 = arith.constant 0 : index
    %26 = vector.load %arg6[%c0_14, %c0_15] : memref<512x32xf32, #tpu.memory_space<vmem>>, vector<512x32xf32>
    tpu.vector_store %arg6[%c0_14, %c0_15], %25 {strides = array<i32>} : memref<512x32xf32, #tpu.memory_space<vmem>>, vector<512x32xf32>,
    return
  }
  func.func @transform_0(%arg0: i32) -> (i32, i32) {
    %c0_i32 = arith.constant 0 : i32
    %c0_i32_0 = arith.constant 0 : i32
    return %arg0, %c0_i32 : i32, i32
  }
  func.func @transform_1(%arg0: i32) -> (i32, i32) {
    %c0_i32 = arith.constant 0 : i32
    %c0_i32_0 = arith.constant 0 : i32
    %c0_i32_1 = arith.constant 0 : i32
    return %c0_i32, %c0_i32_0 : i32, i32
  }
  func.func @transform_2(%arg0: i32) -> (i32, i32) {
    %c0_i32 = arith.constant 0 : i32
    %c0_i32_0 = arith.constant 0 : i32
    %c0_i32_1 = arith.constant 0 : i32
    return %c0_i32, %c0_i32_0 : i32, i32
  }
  func.func @transform_3(%arg0: i32) -> (i32, i32) {
    %c0_i32 = arith.constant 0 : i32
    %c0_i32_0 = arith.constant 0 : i32
    %c0_i32_1 = arith.constant 0 : i32
    return %c0_i32, %c0_i32_0 : i32, i32
  }
  func.func @transform_4(%arg0: i32) -> (i32, i32) {
    %c0_i32 = arith.constant 0 : i32
    %c0_i32_0 = arith.constant 0 : i32
    %c0_i32_1 = arith.constant 0 : i32
    return %c0_i32, %c0_i32_0 : i32, i32
  }
  func.func @transform_5(%arg0: i32) -> (i32, i32) {
    %c0_i32 = arith.constant 0 : i32
    %c0_i32_0 = arith.constant 0 : i32
    return %arg0, %c0_i32 : i32, i32
  }
}

</mosaic_0001>

<llo_original>
// kernel: tpu_custom_call.1
$region0: #{tpu_custom_call.1}
  #allocation0 [shape = 'u32[]', space=smem, size = 0x4, offset = 0x4, fixed_abs, tag = 'smem constant byte address 0x4 - core index']
  #allocation1 [shape = 'u32[144,128]{1,0:T(1,128)}', space=vmem, size = 0x12000, scoped, tag = 'internal scratch']
  %s0 = inlined_call_operand.hbm [shape: f32[8,128], index: 0, kind: input, shape index: {}]
  %s1 = inlined_call_operand.hbm [shape: f32[16,128], index: 1, kind: input, shape index: {}]
  %s2 = inlined_call_operand.hbm [shape: f32[16,128], index: 2, kind: output, shape index: {}]
  %s3 = sld [smem:[#allocation0]]
  $region49: #{tpu_custom_call.1} parent=0
    _
  %s5 = ssub.s32 1, %s3
  %s6 = scalar_select 0, %s5, %s3
  $region1: #{tpu_custom_call.1} parent=0
    #allocation2 [shape = 'u8[4096]{0}', space=vmem, size = 0x1000, scoped, tag = 'input window, operand 0, single buffered']
    #allocation3 [shape = 's32[2]{0}', space=sflag, size = 0x8, scoped, tag = 'scoped memory for tpu_custom_call.1']
    #allocation4 [shape = 's32[2]{0}', space=sflag, size = 0x8, scoped, tag = 'scoped memory for tpu_custom_call.1']
    #allocation5 [shape = 'u8[8192]{0}', space=vmem, size = 0x2000, scoped, tag = 'input window, operand 1']
    #allocation6 [shape = 's32[2]{0}', space=sflag, size = 0x8, scoped, tag = 'scoped memory for tpu_custom_call.1']
    #allocation7 [shape = 'u8[8192]{0}', space=vmem, size = 0x2000, scoped, tag = 'output window, operand 0']
    %7 = vsyncpa [#allocation3], 0
    %8 = vsyncpa [#allocation6], 0
    %s9 = scalar_lea.sflag [#allocation6], 1
    %10 = vsyncpa %s9, 0
    %11 = vsyncpa [#allocation4], 0
    %s12 = scalar_lea.sflag [#allocation4], 1
    %13 = vsyncpa %s12, 0
    loop: start=0, step=1, limit=4
    $region2: #{tpu_custom_call.1} parent=1 // loop_pre_header
      _
    $region3: #{tpu_custom_call.1} parent=1 // loop_header
      %s15 = sphi 0, %s19
      %p16 = scmp.ge.s32.totalorder %s15, 4
      %s23 = sphi 0, %s23
      %s25 = sphi 0, %s23
      %s26 = sphi 0, %s25
      %s40 = sphi 0, %s26
      %s46 = sphi 0, %s48
      %s49 = sphi 0, %s46
      %s50 = sphi 0, %s49
      %s66 = sphi 0, %s50
      %s72 = sphi 0, %s74
      %s75 = sphi 0, %s72
      %s76 = sphi 0, %s75
      %s92 = sphi 0, %s76
    $region4: #{tpu_custom_call.1} parent=1 // loop_header_branch
      %18 = sbr.rel (%p16) target = $region8
    $region5: #{tpu_custom_call.1} parent=1 // loop_body
      %s20 = ssub.s32 %s15, 1
      %s21 = ssub.s32 %s15, 2
      %s22 = sadd.s32 %s15, 1
      %s24 = sadd.s32 %s23, 1
      %p27 = scmp.eq.s32.totalorder %s15, 1
      %p28 = scmp.ne.s32.totalorder %s23, %s25
      %p29 = scmp.eq.s32.totalorder %s15, 0
      %p30 = por %p28, %p29
      %p31 = scmp.ne.s32.totalorder %s23, %s25
      %p32 = scmp.eq.s32.totalorder %s20, 1
      %p33 = por %p31, %p32
      %p34 = scmp.ne.s32.totalorder %s25, %s26
      %p35 = scmp.eq.s32.totalorder %s20, 0
      %p36 = por %p34, %p35
      %p37 = scmp.ne.s32.totalorder %s25, %s26
      %p38 = scmp.eq.s32.totalorder %s21, 1
      %p39 = por %p37, %p38
      %p41 = scmp.ne.s32.totalorder %s26, %s40
      %p42 = scmp.eq.s32.totalorder %s21, 0
      %p43 = por %p41, %p42
      %s44 = ssub.s32 %s15, %s22
      %p45 = scmp.eq.s32.totalorder %s44, 0
      %s47 = sadd.s32 %s46, 1
      %s48 = scalar_select %p45, %s46, %s47
      %p51 = pneg %p45
      %p52 = scmp.eq.s32.totalorder %s15, 1
      %p53 = por %p51, %p52
      %p54 = scmp.ne.s32.totalorder %s46, %s49
      %p55 = scmp.eq.s32.totalorder %s15, 0
      %p56 = por %p54, %p55
      %p57 = scmp.ne.s32.totalorder %s46, %s49
      %p58 = scmp.eq.s32.totalorder %s20, 1
      %p59 = por %p57, %p58
      %p60 = scmp.ne.s32.totalorder %s49, %s50
      %p61 = scmp.eq.s32.totalorder %s20, 0
      %p62 = por %p60, %p61
      %p63 = scmp.ne.s32.totalorder %s49, %s50
      %p64 = scmp.eq.s32.totalorder %s21, 1
      %p65 = por %p63, %p64
      %p67 = scmp.ne.s32.totalorder %s50, %s66
      %p68 = scmp.eq.s32.totalorder %s21, 0
      %p69 = por %p67, %p68
      %s70 = ssub.s32 %s15, %s22
      %p71 = scmp.eq.s32.totalorder %s70, 0
      %s73 = sadd.s32 %s72, 1
      %s74 = scalar_select %p71, %s72, %s73
      %p77 = pneg %p71
      %p78 = scmp.eq.s32.totalorder %s15, 1
      %p79 = por %p77, %p78
      %p80 = scmp.ne.s32.totalorder %s72, %s75
      %p81 = scmp.eq.s32.totalorder %s15, 0
      %p82 = por %p80, %p81
      %p83 = scmp.ne.s32.totalorder %s72, %s75
      %p84 = scmp.eq.s32.totalorder %s20, 1
      %p85 = por %p83, %p84
      %p86 = scmp.ne.s32.totalorder %s75, %s76
      %p87 = scmp.eq.s32.totalorder %s20, 0
      %p88 = por %p86, %p87
      %p89 = scmp.ne.s32.totalorder %s75, %s76
      %p90 = scmp.eq.s32.totalorder %s21, 1
      %p91 = por %p89, %p90
      %p93 = scmp.ne.s32.totalorder %s76, %s92
      %p94 = scmp.eq.s32.totalorder %s21, 0
      %p95 = por %p93, %p94
      %p96 = scmp.le.s32.totalorder 1, %s15
      %p97 = scmp.lt.s32.totalorder %s15, 3
      %p98 = pnand %p96, %p97
      %p99 = pneg %p98
      // Predicated region
      $region9: #{tpu_custom_call.1} parent=5 // pred_check
        _
      $region10: #{tpu_custom_call.1} parent=5 // pred_check_branch
        %101 = sbr.rel (%p98) target = $region12
      $region11: #{tpu_custom_call.1} parent=5 // pred_region
        %s102 = ssub.s32 %s15, 1
        // Predicated region
        $region13: #{tpu_custom_call.1} parent=11 // pred_check
          %p103 = pneg %p36
        $region14: #{tpu_custom_call.1} parent=11 // pred_check_branch
          %105 = sbr.rel (%p103) target = $region16
        $region15: #{tpu_custom_call.1} parent=11 // pred_region
          %s107 = ssub.s32 128, 128
          %108 = vsyncadd [#allocation3], %s107
          %s110 = sshll.u32 [#allocation2], 4
          %s111 = int_to_ptr.vmem [resolvable:$true] %s110
          %113 = dma.hbm_to_vmem [thread:$0]  %s0, 128, %s111, [#allocation3]
        $region16: #{tpu_custom_call.1} parent=11 // pred_fallthru
          _
      $region12: #{tpu_custom_call.1} parent=5 // pred_fallthru
        _
      %p114 = scmp.lt.s32.totalorder %s15, 2
      // Predicated region
      $region17: #{tpu_custom_call.1} parent=5 // pred_check
        %p115 = pneg %p114
      $region18: #{tpu_custom_call.1} parent=5 // pred_check_branch
        %117 = sbr.rel (%p115) target = $region20
      $region19: #{tpu_custom_call.1} parent=5 // pred_region
        // Predicated region
        $region21: #{tpu_custom_call.1} parent=19 // pred_check
          %p118 = pneg %p56
        $region22: #{tpu_custom_call.1} parent=19 // pred_check_branch
          %120 = sbr.rel (%p118) target = $region24
        $region23: #{tpu_custom_call.1} parent=19 // pred_region
          %s121 = sand.u32 %s46, 1
          %s122 = scalar_lea.sflag [#allocation6], %s121
          %s123 = sand.u32 %s46, 1
          %s124 = smul.addr %s123, 8
          %s125 = scalar_lea.vmem [#allocation5], %s124
          %s127 = ssub.s32 128, 128
          %128 = vsyncadd %s122, %s127
          %s129 = smul.addr %s15, 128
          %s130 = scalar_lea.hbm %s1, %s129
          %s132 = sshll.u32 %s125, 4
          %s133 = int_to_ptr.vmem [resolvable:$true] %s132
          %135 = dma.hbm_to_vmem [thread:$0]  %s130, 128, %s133, %s122
        $region24: #{tpu_custom_call.1} parent=19 // pred_fallthru
          _
      $region20: #{tpu_custom_call.1} parent=5 // pred_fallthru
        _
      %p136 = scmp.le.s32.totalorder 1, %s15
      %p137 = scmp.lt.s32.totalorder %s15, 3
      %p138 = pnand %p136, %p137
      %p139 = pneg %p138
      // Predicated region
      $region25: #{tpu_custom_call.1} parent=5 // pred_check
        _
      $region26: #{tpu_custom_call.1} parent=5 // pred_check_branch
        %141 = sbr.rel (%p138) target = $region28
      $region27: #{tpu_custom_call.1} parent=5 // pred_region
        %s142 = ssub.s32 %s15, 1
        // Predicated region
        $region29: #{tpu_custom_call.1} parent=27 // pred_check
          %p143 = pneg %p36
        $region30: #{tpu_custom_call.1} parent=27 // pred_check_branch
          %145 = sbr.rel (%p143) target = $region32
        $region31: #{tpu_custom_call.1} parent=27 // pred_region
          %146 = dma.done [#allocation3], 128
        $region32: #{tpu_custom_call.1} parent=27 // pred_fallthru
          _
        %s147 = sand.u32 %s49, 1
        %s148 = scalar_lea.sflag [#allocation6], %s147
        %s149 = sand.u32 %s49, 1
        %s150 = smul.addr %s149, 8
        %s151 = scalar_lea.vmem [#allocation5], %s150
        // Predicated region
        $region33: #{tpu_custom_call.1} parent=27 // pred_check
          %p152 = pneg %p62
        $region34: #{tpu_custom_call.1} parent=27 // pred_check_branch
          %154 = sbr.rel (%p152) target = $region36
        $region35: #{tpu_custom_call.1} parent=27 // pred_region
          %155 = dma.done %s148, 128
        $region36: #{tpu_custom_call.1} parent=27 // pred_fallthru
          _
        %p156 = pneg %p36
        %p157 = pneg %p33
        %s158 = sand.u32 %s49, 1
        %s159 = scalar_lea.sflag [#allocation6], %s158
        %s160 = sand.u32 %s49, 1
        %s161 = smul.addr %s160, 8
        %s162 = scalar_lea.vmem [#allocation5], %s161
        %p163 = pneg %p62
        %p164 = pneg %p59
        %p165 = pneg %p88
        %p166 = pneg %p85
        %s167 = sand.u32 %s75, 1
        %s168 = scalar_lea.sflag [#allocation4], %s167
        %s169 = sand.u32 %s75, 1
        %s170 = smul.addr %s169, 8
        %s171 = scalar_lea.vmem [#allocation7], %s170
        %v172 = vld [vmem:[%s151] sm:$0xff]
        %v173 = vld [vmem:[#allocation2] sm:$0xff]
        %v174 = vadd.f32 %v172, %v173
        %175 = vst [vmem:[%s171] sm:$0xff] %v174
        %s176 = sand.u32 %s75, 1
        %s177 = scalar_lea.sflag [#allocation4], %s176
        %s178 = sand.u32 %s75, 1
        %s179 = smul.addr %s178, 8
        %s180 = scalar_lea.vmem [#allocation7], %s179
        // Predicated region
        $region37: #{tpu_custom_call.1} parent=27 // pred_check
          %p181 = pneg %p85
        $region38: #{tpu_custom_call.1} parent=27 // pred_check_branch
          %183 = sbr.rel (%p181) target = $region40
        $region39: #{tpu_custom_call.1} parent=27 // pred_region
          %s185 = ssub.s32 128, 128
          %186 = vsyncadd %s177, %s185
          %s187 = smul.addr %s20, 128
          %s188 = scalar_lea.hbm %s2, %s187
          %s190 = sshll.u32 %s180, 4
          %s191 = int_to_ptr.vmem [resolvable:$true] %s190
          %193 = dma.vmem_to_hbm [thread:$0]  %s191, 128, %s188, %s177
        $region40: #{tpu_custom_call.1} parent=27 // pred_fallthru
          _
      $region28: #{tpu_custom_call.1} parent=5 // pred_fallthru
        _
      %p194 = scmp.le.s32.totalorder 2, %s15
      // Predicated region
      $region41: #{tpu_custom_call.1} parent=5 // pred_check
        %p195 = pneg %p194
      $region42: #{tpu_custom_call.1} parent=5 // pred_check_branch
        %197 = sbr.rel (%p195) target = $region44
      $region43: #{tpu_custom_call.1} parent=5 // pred_region
        %s198 = ssub.s32 %s15, 2
        // Predicated region
        $region45: #{tpu_custom_call.1} parent=43 // pred_check
          %p199 = pneg %p91
        $region46: #{tpu_custom_call.1} parent=43 // pred_check_branch
          %201 = sbr.rel (%p199) target = $region48
        $region47: #{tpu_custom_call.1} parent=43 // pred_region
          %s202 = sand.u32 %s76, 1
          %s203 = scalar_lea.sflag [#allocation4], %s202
          %s204 = sand.u32 %s76, 1
          %s205 = smul.addr %s204, 8
          %s206 = scalar_lea.vmem [#allocation7], %s205
          %207 = dma.done %s203, 128
        $region48: #{tpu_custom_call.1} parent=43 // pred_fallthru
          _
      $region44: #{tpu_custom_call.1} parent=5 // pred_fallthru
        _
    $region6: #{tpu_custom_call.1} parent=1 // loop_footer
      %s19 = sadd.s32 1, %s15
    $region7: #{tpu_custom_call.1} parent=1 // loop_footer_branch
      %14 = sbr.rel target = $region3
    $region8: #{tpu_custom_call.1} parent=1 // loop_exit
      _
    %208 = vsyncpa [#allocation3], 1
    %s209 = scalar_lea.sflag [#allocation3], 1
    %210 = vsyncpa %s209, 1
    %211 = vsyncpa [#allocation6], 1
    %s212 = scalar_lea.sflag [#allocation6], 1
    %213 = vsyncpa %s212, 1
    %214 = vsyncpa [#allocation4], 1
    %s215 = scalar_lea.sflag [#allocation4], 1
    %216 = vsyncpa %s215, 1

// kernel: tpu_custom_call.1
$region0: #{tpu_custom_call.1}
  #allocation0 [shape = 'u32[]', space=smem, size = 0x4, offset = 0x4, fixed_abs, tag = 'smem constant byte address 0x4 - core index']
  #allocation1 [shape = 'u32[144,128]{1,0:T(1,128)}', space=vmem, size = 0x12000, scoped, tag = 'internal scratch']
  %s0 = inlined_call_operand.vmem [shape: f32[1024,4], index: 0, kind: input, shape index: {}]
  %s1 = inlined_call_operand.vmem [shape: bf16[4,64], index: 1, kind: input, shape index: {}]
  %s2 = inlined_call_operand.vmem [shape: f32[1,64], index: 2, kind: input, shape index: {}]
  %s3 = inlined_call_operand.vmem [shape: bf16[64,32], index: 3, kind: input, shape index: {}]
  %s4 = inlined_call_operand.vmem [shape: f32[1,32], index: 4, kind: input, shape index: {}]
  %s5 = inlined_call_operand.vmem [shape: f32[1024,32], index: 5, kind: output, shape index: {}]
  %s6 = sld [smem:[#allocation0]]
  $region53: #{tpu_custom_call.1} parent=0
    _
  %s8 = ssub.s32 1, %s6
  %s9 = scalar_select 0, %s8, %s6
  loop: start=0, step=1, limit=4
  $region2: #{tpu_custom_call.1} parent=0 // loop_pre_header
    _
  $region3: #{tpu_custom_call.1} parent=0 // loop_header
    %s11 = sphi 0, %s15
    %p12 = scmp.ge.s32.totalorder %s11, 4
    %s21 = sphi 0, %s23
    %s24 = sphi 0, %s21
    %s25 = sphi 0, %s24
    %s41 = sphi 0, %s25
    %s45 = sphi 0, %s45
    %s47 = sphi 0, %s45
    %s48 = sphi 0, %s47
    %s62 = sphi 0, %s48
    %s66 = sphi 0, %s66
    %s68 = sphi 0, %s66
    %s69 = sphi 0, %s68
    %s83 = sphi 0, %s69
    %s87 = sphi 0, %s87
    %s89 = sphi 0, %s87
    %s90 = sphi 0, %s89
    %s104 = sphi 0, %s90
    %s108 = sphi 0, %s108
    %s110 = sphi 0, %s108
    %s111 = sphi 0, %s110
    %s125 = sphi 0, %s111
    %s131 = sphi 0, %s133
    %s134 = sphi 0, %s131
    %s135 = sphi 0, %s134
    %s151 = sphi 0, %s135
  $region4: #{tpu_custom_call.1} parent=0 // loop_header_branch
    %14 = sbr.rel (%p12) target = $region8
  $region5: #{tpu_custom_call.1} parent=0 // loop_body
    %s16 = ssub.s32 %s11, 1
    %s17 = ssub.s32 %s11, 2
    %s18 = sadd.s32 %s11, 1
    %s19 = ssub.s32 %s11, %s18
    %p20 = scmp.eq.s32.totalorder %s19, 0
    %s22 = sadd.s32 %s21, 1
    %s23 = scalar_select %p20, %s21, %s22
    %p26 = pneg %p20
    %p27 = scmp.eq.s32.totalorder %s11, 1
    %p28 = por %p26, %p27
    %p29 = scmp.ne.s32.totalorder %s21, %s24
    %p30 = scmp.eq.s32.totalorder %s11, 0
    %p31 = por %p29, %p30
    %p32 = scmp.ne.s32.totalorder %s21, %s24
    %p33 = scmp.eq.s32.totalorder %s16, 1
    %p34 = por %p32, %p33
    %p35 = scmp.ne.s32.totalorder %s24, %s25
    %p36 = scmp.eq.s32.totalorder %s16, 0
    %p37 = por %p35, %p36
    %p38 = scmp.ne.s32.totalorder %s24, %s25
    %p39 = scmp.eq.s32.totalorder %s17, 1
    %p40 = por %p38, %p39
    %p42 = scmp.ne.s32.totalorder %s25, %s41
    %p43 = scmp.eq.s32.totalorder %s17, 0
    %p44 = por %p42, %p43
    %s46 = sadd.s32 %s45, 1
    %p49 = scmp.eq.s32.totalorder %s11, 1
    %p50 = scmp.ne.s32.totalorder %s45, %s47
    %p51 = scmp.eq.s32.totalorder %s11, 0
    %p52 = por %p50, %p51
    %p53 = scmp.ne.s32.totalorder %s45, %s47
    %p54 = scmp.eq.s32.totalorder %s16, 1
    %p55 = por %p53, %p54
    %p56 = scmp.ne.s32.totalorder %s47, %s48
    %p57 = scmp.eq.s32.totalorder %s16, 0
    %p58 = por %p56, %p57
    %p59 = scmp.ne.s32.totalorder %s47, %s48
    %p60 = scmp.eq.s32.totalorder %s17, 1
    %p61 = por %p59, %p60
    %p63 = scmp.ne.s32.totalorder %s48, %s62
    %p64 = scmp.eq.s32.totalorder %s17, 0
    %p65 = por %p63, %p64
    %s67 = sadd.s32 %s66, 1
    %p70 = scmp.eq.s32.totalorder %s11, 1
    %p71 = scmp.ne.s32.totalorder %s66, %s68
    %p72 = scmp.eq.s32.totalorder %s11, 0
    %p73 = por %p71, %p72
    %p74 = scmp.ne.s32.totalorder %s66, %s68
    %p75 = scmp.eq.s32.totalorder %s16, 1
    %p76 = por %p74, %p75
    %p77 = scmp.ne.s32.totalorder %s68, %s69
    %p78 = scmp.eq.s32.totalorder %s16, 0
    %p79 = por %p77, %p78
    %p80 = scmp.ne.s32.totalorder %s68, %s69
    %p81 = scmp.eq.s32.totalorder %s17, 1
    %p82 = por %p80, %p81
    %p84 = scmp.ne.s32.totalorder %s69, %s83
    %p85 = scmp.eq.s32.totalorder %s17, 0
    %p86 = por %p84, %p85
    %s88 = sadd.s32 %s87, 1
    %p91 = scmp.eq.s32.totalorder %s11, 1
    %p92 = scmp.ne.s32.totalorder %s87, %s89
    %p93 = scmp.eq.s32.totalorder %s11, 0
    %p94 = por %p92, %p93
    %p95 = scmp.ne.s32.totalorder %s87, %s89
    %p96 = scmp.eq.s32.totalorder %s16, 1
    %p97 = por %p95, %p96
    %p98 = scmp.ne.s32.totalorder %s89, %s90
    %p99 = scmp.eq.s32.totalorder %s16, 0
    %p100 = por %p98, %p99
    %p101 = scmp.ne.s32.totalorder %s89, %s90
    %p102 = scmp.eq.s32.totalorder %s17, 1
    %p103 = por %p101, %p102
    %p105 = scmp.ne.s32.totalorder %s90, %s104
    %p106 = scmp.eq.s32.totalorder %s17, 0
    %p107 = por %p105, %p106
    %s109 = sadd.s32 %s108, 1
    %p112 = scmp.eq.s32.totalorder %s11, 1
    %p113 = scmp.ne.s32.totalorder %s108, %s110
    %p114 = scmp.eq.s32.totalorder %s11, 0
    %p115 = por %p113, %p114
    %p116 = scmp.ne.s32.totalorder %s108, %s110
    %p117 = scmp.eq.s32.totalorder %s16, 1
    %p118 = por %p116, %p117
    %p119 = scmp.ne.s32.totalorder %s110, %s111
    %p120 = scmp.eq.s32.totalorder %s16, 0
    %p121 = por %p119, %p120
    %p122 = scmp.ne.s32.totalorder %s110, %s111
    %p123 = scmp.eq.s32.totalorder %s17, 1
    %p124 = por %p122, %p123
    %p126 = scmp.ne.s32.totalorder %s111, %s125
    %p127 = scmp.eq.s32.totalorder %s17, 0
    %p128 = por %p126, %p127
    %s129 = ssub.s32 %s11, %s18
    %p130 = scmp.eq.s32.totalorder %s129, 0
    %s132 = sadd.s32 %s131, 1
    %s133 = scalar_select %p130, %s131, %s132
    %p136 = pneg %p130
    %p137 = scmp.eq.s32.totalorder %s11, 1
    %p138 = por %p136, %p137
    %p139 = scmp.ne.s32.totalorder %s131, %s134
    %p140 = scmp.eq.s32.totalorder %s11, 0
    %p141 = por %p139, %p140
    %p142 = scmp.ne.s32.totalorder %s131, %s134
    %p143 = scmp.eq.s32.totalorder %s16, 1
    %p144 = por %p142, %p143
    %p145 = scmp.ne.s32.totalorder %s134, %s135
    %p146 = scmp.eq.s32.totalorder %s16, 0
    %p147 = por %p145, %p146
    %p148 = scmp.ne.s32.totalorder %s134, %s135
    %p149 = scmp.eq.s32.totalorder %s17, 1
    %p150 = por %p148, %p149
    %p152 = scmp.ne.s32.totalorder %s135, %s151
    %p153 = scmp.eq.s32.totalorder %s17, 0
    %p154 = por %p152, %p153
    %p155 = scmp.le.s32.totalorder 1, %s11
    %p156 = scmp.lt.s32.totalorder %s11, 3
    %p157 = pnand %p155, %p156
    %p158 = pneg %p157
    // Predicated region
    $region9: #{tpu_custom_call.1} parent=5 // pred_check
      _
    $region10: #{tpu_custom_call.1} parent=5 // pred_check_branch
      %160 = sbr.rel (%p157) target = $region12
    $region11: #{tpu_custom_call.1} parent=5 // pred_region
      %s161 = ssub.s32 %s11, 1
      // Predicated region
      $region13: #{tpu_custom_call.1} parent=11 // pred_check
        %p162 = pneg %p58
      $region14: #{tpu_custom_call.1} parent=11 // pred_check_branch
        %164 = sbr.rel (%p162) target = $region16
      $region15: #{tpu_custom_call.1} parent=11 // pred_region
        _
      $region16: #{tpu_custom_call.1} parent=11 // pred_fallthru
        _
      // Predicated region
      $region17: #{tpu_custom_call.1} parent=11 // pred_check
        %p165 = pneg %p79
      $region18: #{tpu_custom_call.1} parent=11 // pred_check_branch
        %167 = sbr.rel (%p165) target = $region20
      $region19: #{tpu_custom_call.1} parent=11 // pred_region
        _
      $region20: #{tpu_custom_call.1} parent=11 // pred_fallthru
        _
      // Predicated region
      $region21: #{tpu_custom_call.1} parent=11 // pred_check
        %p168 = pneg %p100
      $region22: #{tpu_custom_call.1} parent=11 // pred_check_branch
        %170 = sbr.rel (%p168) target = $region24
      $region23: #{tpu_custom_call.1} parent=11 // pred_region
        _
      $region24: #{tpu_custom_call.1} parent=11 // pred_fallthru
        _
      // Predicated region
      $region25: #{tpu_custom_call.1} parent=11 // pred_check
        %p171 = pneg %p121
      $region26: #{tpu_custom_call.1} parent=11 // pred_check_branch
        %173 = sbr.rel (%p171) target = $region28
      $region27: #{tpu_custom_call.1} parent=11 // pred_region
        _
      $region28: #{tpu_custom_call.1} parent=11 // pred_fallthru
        _
    $region12: #{tpu_custom_call.1} parent=5 // pred_fallthru
      _
    %p174 = scmp.lt.s32.totalorder %s11, 2
    // Predicated region
    $region29: #{tpu_custom_call.1} parent=5 // pred_check
      %p175 = pneg %p174
    $region30: #{tpu_custom_call.1} parent=5 // pred_check_branch
      %177 = sbr.rel (%p175) target = $region32
    $region31: #{tpu_custom_call.1} parent=5 // pred_region
      // Predicated region
      $region33: #{tpu_custom_call.1} parent=31 // pred_check
        %p178 = pneg %p31
      $region34: #{tpu_custom_call.1} parent=31 // pred_check_branch
        %180 = sbr.rel (%p178) target = $region36
      $region35: #{tpu_custom_call.1} parent=31 // pred_region
        %s181 = smul.u32 64, %s11
        %p182 = scmp.lt.s32.totalorder %s181, 127
        %s183 = scalar_select %p182, %s181, 127
        %s184 = smul.addr %s183, 8
        %s185 = scalar_lea.vmem %s0, %s184
        %s186 = smul.u32 64, %s11
      $region36: #{tpu_custom_call.1} parent=31 // pred_fallthru
        _
    $region32: #{tpu_custom_call.1} parent=5 // pred_fallthru
      _
    %p187 = scmp.le.s32.totalorder 1, %s11
    %p188 = scmp.lt.s32.totalorder %s11, 3
    %p189 = pnand %p187, %p188
    %p190 = pneg %p189
    // Predicated region
    $region37: #{tpu_custom_call.1} parent=5 // pred_check
      _
    $region38: #{tpu_custom_call.1} parent=5 // pred_check_branch
      %192 = sbr.rel (%p189) target = $region40
    $region39: #{tpu_custom_call.1} parent=5 // pred_region
      %s193 = ssub.s32 %s11, 1
      %s194 = smul.u32 64, %s16
      %p195 = scmp.lt.s32.totalorder %s194, 127
      %s196 = scalar_select %p195, %s194, 127
      %s197 = smul.addr %s196, 8
      %s198 = scalar_lea.vmem %s0, %s197
      %p199 = pneg %p37
      %p200 = pneg %p34
      %p201 = pneg %p58
      %p202 = pneg %p55
      %p203 = pneg %p79
      %p204 = pneg %p76
      %p205 = pneg %p100
      %p206 = pneg %p97
      %p207 = pneg %p121
      %p208 = pneg %p118
      %p209 = pneg %p147
      %p210 = pneg %p144
      %s211 = smul.u32 64, %s16
      %p212 = scmp.lt.s32.totalorder %s211, 127
      %s213 = scalar_select %p212, %s211, 127
      %s214 = smul.addr %s213, 8
      %s215 = scalar_lea.vmem %s5, %s214
      %s216 = smul.u32 64, %s16
      %p217 = scmp.lt.s32.totalorder %s216, 127
      %s218 = scalar_select %p217, %s216, 127
      %s219 = smul.addr %s218, 8
      %s220 = scalar_lea.vmem %s0, %s219
      %s221 = smul.u32 64, %s16
      %s222 = smul.u32 64, %s16
      %p223 = scmp.lt.s32.totalorder %s222, 127
      %s224 = scalar_select %p223, %s222, 127
      %s225 = smul.addr %s224, 8
      %s226 = scalar_lea.vmem %s5, %s225
      %s227 = smul.u32 64, %s16
      %v229 = vld [vmem:[%s220] sm:$0xff]
      %v230 = vld [vmem:[%s220 + $0x8] sm:$0xff]
      %v231 = vld [vmem:[%s220 + $0x10] sm:$0xff]
      %v232 = vld [vmem:[%s220 + $0x18] sm:$0xff]
      %v233 = vld [vmem:[%s220 + $0x20] sm:$0xff]
      %v234 = vld [vmem:[%s220 + $0x28] sm:$0xff]
      %v235 = vld [vmem:[%s220 + $0x30] sm:$0xff]
      %v236 = vld [vmem:[%s220 + $0x38] sm:$0xff]
      %v237 = vld [vmem:[%s220 + $0x40] sm:$0xff]
      %v238 = vld [vmem:[%s220 + $0x48] sm:$0xff]
      %v239 = vld [vmem:[%s220 + $0x50] sm:$0xff]
      %v240 = vld [vmem:[%s220 + $0x58] sm:$0xff]
      %v241 = vld [vmem:[%s220 + $0x60] sm:$0xff]
      %v242 = vld [vmem:[%s220 + $0x68] sm:$0xff]
      %v243 = vld [vmem:[%s220 + $0x70] sm:$0xff]
      %v244 = vld [vmem:[%s220 + $0x78] sm:$0xff]
      %v245 = vld [vmem:[%s220 + $0x80] sm:$0xff]
      %v246 = vld [vmem:[%s220 + $0x88] sm:$0xff]
      %v247 = vld [vmem:[%s220 + $0x90] sm:$0xff]
      %v248 = vld [vmem:[%s220 + $0x98] sm:$0xff]
      %v249 = vld [vmem:[%s220 + $0xa0] sm:$0xff]
      %v250 = vld [vmem:[%s220 + $0xa8] sm:$0xff]
      %v251 = vld [vmem:[%s220 + $0xb0] sm:$0xff]
      %v252 = vld [vmem:[%s220 + $0xb8] sm:$0xff]
      %v253 = vld [vmem:[%s220 + $0xc0] sm:$0xff]
      %v254 = vld [vmem:[%s220 + $0xc8] sm:$0xff]
      %v255 = vld [vmem:[%s220 + $0xd0] sm:$0xff]
      %v256 = vld [vmem:[%s220 + $0xd8] sm:$0xff]
      %v257 = vld [vmem:[%s220 + $0xe0] sm:$0xff]
      %v258 = vld [vmem:[%s220 + $0xe8] sm:$0xff]
      %v259 = vld [vmem:[%s220 + $0xf0] sm:$0xff]
      %v260 = vld [vmem:[%s220 + $0xf8] sm:$0xff]
      %v261 = vld [vmem:[%s220 + $0x100] sm:$0xff]
      %v262 = vld [vmem:[%s220 + $0x108] sm:$0xff]
      %v263 = vld [vmem:[%s220 + $0x110] sm:$0xff]
      %v264 = vld [vmem:[%s220 + $0x118] sm:$0xff]
      %v265 = vld [vmem:[%s220 + $0x120] sm:$0xff]
      %v266 = vld [vmem:[%s220 + $0x128] sm:$0xff]
      %v267 = vld [vmem:[%s220 + $0x130] sm:$0xff]
      %v268 = vld [vmem:[%s220 + $0x138] sm:$0xff]
      %v269 = vld [vmem:[%s220 + $0x140] sm:$0xff]
      %v270 = vld [vmem:[%s220 + $0x148] sm:$0xff]
      %v271 = vld [vmem:[%s220 + $0x150] sm:$0xff]
      %v272 = vld [vmem:[%s220 + $0x158] sm:$0xff]
      %v273 = vld [vmem:[%s220 + $0x160] sm:$0xff]
      %v274 = vld [vmem:[%s220 + $0x168] sm:$0xff]
      %v275 = vld [vmem:[%s220 + $0x170] sm:$0xff]
      %v276 = vld [vmem:[%s220 + $0x178] sm:$0xff]
      %v277 = vld [vmem:[%s220 + $0x180] sm:$0xff]
      %v278 = vld [vmem:[%s220 + $0x188] sm:$0xff]
      %v279 = vld [vmem:[%s220 + $0x190] sm:$0xff]
      %v280 = vld [vmem:[%s220 + $0x198] sm:$0xff]
      %v281 = vld [vmem:[%s220 + $0x1a0] sm:$0xff]
      %v282 = vld [vmem:[%s220 + $0x1a8] sm:$0xff]
      %v283 = vld [vmem:[%s220 + $0x1b0] sm:$0xff]
      %v284 = vld [vmem:[%s220 + $0x1b8] sm:$0xff]
      %v285 = vld [vmem:[%s220 + $0x1c0] sm:$0xff]
      %v286 = vld [vmem:[%s220 + $0x1c8] sm:$0xff]
      %v287 = vld [vmem:[%s220 + $0x1d0] sm:$0xff]
      %v288 = vld [vmem:[%s220 + $0x1d8] sm:$0xff]
      %v289 = vld [vmem:[%s220 + $0x1e0] sm:$0xff]
      %v290 = vld [vmem:[%s220 + $0x1e8] sm:$0xff]
      %v291 = vld [vmem:[%s220 + $0x1f0] sm:$0xff]
      %v292 = vld [vmem:[%s220 + $0x1f8] sm:$0xff]
      %v293 = vpack.c.bf16 %v230, %v229
      %v294 = vpack.c.bf16 %v232, %v231
      %v295 = vpack.c.bf16 %v234, %v233
      %v296 = vpack.c.bf16 %v236, %v235
      %v297 = vpack.c.bf16 %v238, %v237
      %v298 = vpack.c.bf16 %v240, %v239
      %v299 = vpack.c.bf16 %v242, %v241
      %v300 = vpack.c.bf16 %v244, %v243
      %v301 = vpack.c.bf16 %v246, %v245
      %v302 = vpack.c.bf16 %v248, %v247
      %v303 = vpack.c.bf16 %v250, %v249
      %v304 = vpack.c.bf16 %v252, %v251
      %v305 = vpack.c.bf16 %v254, %v253
      %v306 = vpack.c.bf16 %v256, %v255
      %v307 = vpack.c.bf16 %v258, %v257
      %v308 = vpack.c.bf16 %v260, %v259
      %v309 = vpack.c.bf16 %v262, %v261
      %v310 = vpack.c.bf16 %v264, %v263
      %v311 = vpack.c.bf16 %v266, %v265
      %v312 = vpack.c.bf16 %v268, %v267
      %v313 = vpack.c.bf16 %v270, %v269
      %v314 = vpack.c.bf16 %v272, %v271
      %v315 = vpack.c.bf16 %v274, %v273
      %v316 = vpack.c.bf16 %v276, %v275
      %v317 = vpack.c.bf16 %v278, %v277
      %v318 = vpack.c.bf16 %v280, %v279
      %v319 = vpack.c.bf16 %v282, %v281
      %v320 = vpack.c.bf16 %v284, %v283
      %v321 = vpack.c.bf16 %v286, %v285
      %v322 = vpack.c.bf16 %v288, %v287
      %v323 = vpack.c.bf16 %v290, %v289
      %v324 = vpack.c.bf16 %v292, %v291
      %v325 = vld [vmem:[%s1] sm:$0x3]
      %v326 = vld [vmem:[%s2] sm:$0x1]
      %v328 = vlaneseq
      %v329 = vshrl.u32 %v328, 7
      %v330 = vsub.s32 0, %v329
      %v331 = vrot.slane %v326, %v330
      %vm333 = vcmask 31744
      %v335 = vsel %vm333, %v293, 0
      %v338 = vsel %vm333, %v294, 0
      %v341 = vsel %vm333, %v295, 0
      %v344 = vsel %vm333, %v296, 0
      %v347 = vsel %vm333, %v297, 0
      %v350 = vsel %vm333, %v298, 0
      %v353 = vsel %vm333, %v299, 0
      %v356 = vsel %vm333, %v300, 0
      %v359 = vsel %vm333, %v301, 0
      %v362 = vsel %vm333, %v302, 0
      %v365 = vsel %vm333, %v303, 0
      %v368 = vsel %vm333, %v304, 0
      %v371 = vsel %vm333, %v305, 0
      %v374 = vsel %vm333, %v306, 0
      %v377 = vsel %vm333, %v307, 0
      %v380 = vsel %vm333, %v308, 0
      %v383 = vsel %vm333, %v309, 0
      %v386 = vsel %vm333, %v310, 0
      %v389 = vsel %vm333, %v311, 0
      %v392 = vsel %vm333, %v312, 0
      %v395 = vsel %vm333, %v313, 0
      %v398 = vsel %vm333, %v314, 0
      %v401 = vsel %vm333, %v315, 0
      %v404 = vsel %vm333, %v316, 0
      %v407 = vsel %vm333, %v317, 0
      %v410 = vsel %vm333, %v318, 0
      %v413 = vsel %vm333, %v319, 0
      %v416 = vsel %vm333, %v320, 0
      %v419 = vsel %vm333, %v321, 0
      %v422 = vsel %vm333, %v322, 0
      %v425 = vsel %vm333, %v323, 0
      %v428 = vsel %vm333, %v324, 0
      %vm430 = vcmask 1041408
      %v432 = vsel %vm430, %v325, 0
      %434 = vmatprep.subr.bf16.mxu0 0
      %435 = vmatpush1.bf16.msra.mxu0 0
      %436 = vmatprep.subr.bf16.mxu0 0
      %437 = vmatpush1.bf16.msra.mxu0 0
      %438 = vmatprep.subr.bf16.mxu0 0
      %439 = vmatpush1.bf16.msra.mxu0 0
      %440 = vmatprep.subr.bf16.mxu0 0
      %441 = vmatpush1.bf16.msra.mxu0 0
      %442 = vmatprep.subr.bf16.mxu0 0
      %443 = vmatpush1.bf16.msra.mxu0 0
      %444 = vmatprep.subr.bf16.mxu0 0
      %445 = vmatpush1.bf16.msra.mxu0 0
      %446 = vmatprep.subr.bf16.mxu0 0
      %447 = vmatpush1.bf16.msra.mxu0 0
      %448 = vmatprep.subr.bf16.mxu0 0
      %449 = vmatpush1.bf16.msra.mxu0 %v432
      %450 = vmatprep.subr.bf16.mxu0 0
      %451 = vmatpush2.bf16.msra.mxu0 0
      %452 = vmatprep.subr.bf16.mxu0 0
      %453 = vmatpush2.bf16.msra.mxu0 0
      %454 = vmatprep.subr.bf16.mxu0 0
      %455 = vmatpush2.bf16.msra.mxu0 0
      %456 = vmatprep.subr.bf16.mxu0 0
      %457 = vmatpush2.bf16.msra.mxu0 0
      %458 = vmatprep.subr.bf16.mxu0 0
      %459 = vmatpush2.bf16.msra.mxu0 0
      %460 = vmatprep.subr.bf16.mxu0 0
      %461 = vmatpush2.bf16.msra.mxu0 0
      %462 = vmatprep.subr.bf16.mxu0 0
      %463 = vmatpush2.bf16.msra.mxu0 0
      %464 = vmatprep.subr.bf16.mxu0 0
      %465 = vmatpush2.bf16.msra.mxu0 0
      %466 = vmatprep.mubr.bf16.mxu0 0
      %467 = vmatmul.mubr.bf16.gmra.mxu0 %v335
      %v468 = vpop.f32.mrf.mxu0
      %v469 = vadd.f32 %v331, %v468
      %v470 = vpop.f32.mrf.mxu0
      %v471 = vpop.f32.mrf.mxu0
      %v472 = vadd.f32 %v331, %v471
      %v473 = vpop.f32.mrf.mxu0
      %474 = vmatprep.mubr.bf16.mxu0 0
      %475 = vmatmul.mubr.bf16.gmra.mxu0 %v338
      %v476 = vpop.f32.mrf.mxu0
      %v477 = vadd.f32 %v331, %v476
      %v478 = vpop.f32.mrf.mxu0
      %v479 = vpop.f32.mrf.mxu0
      %v480 = vadd.f32 %v331, %v479
      %v481 = vpop.f32.mrf.mxu0
      %482 = vmatprep.mubr.bf16.mxu0 0
      %483 = vmatmul.mubr.bf16.gmra.mxu0 %v341
      %v484 = vpop.f32.mrf.mxu0
      %v485 = vadd.f32 %v331, %v484
      %v486 = vpop.f32.mrf.mxu0
      %v487 = vpop.f32.mrf.mxu0
      %v488 = vadd.f32 %v331, %v487
      %v489 = vpop.f32.mrf.mxu0
      %490 = vmatprep.mubr.bf16.mxu0 0
      %491 = vmatmul.mubr.bf16.gmra.mxu0 %v344
      %v492 = vpop.f32.mrf.mxu0
      %v493 = vadd.f32 %v331, %v492
      %v494 = vpop.f32.mrf.mxu0
      %v495 = vpop.f32.mrf.mxu0
      %v496 = vadd.f32 %v331, %v495
      %v497 = vpop.f32.mrf.mxu0
      %498 = vmatprep.mubr.bf16.mxu0 0
      %499 = vmatmul.mubr.bf16.gmra.mxu0 %v347
      %v500 = vpop.f32.mrf.mxu0
      %v501 = vadd.f32 %v331, %v500
      %v502 = vpop.f32.mrf.mxu0
      %v503 = vpop.f32.mrf.mxu0
      %v504 = vadd.f32 %v331, %v503
      %v505 = vpop.f32.mrf.mxu0
      %506 = vmatprep.mubr.bf16.mxu0 0
      %507 = vmatmul.mubr.bf16.gmra.mxu0 %v350
      %v508 = vpop.f32.mrf.mxu0
      %v509 = vadd.f32 %v331, %v508
      %v510 = vpop.f32.mrf.mxu0
      %v511 = vpop.f32.mrf.mxu0
      %v512 = vadd.f32 %v331, %v511
      %v513 = vpop.f32.mrf.mxu0
      %514 = vmatprep.mubr.bf16.mxu0 0
      %515 = vmatmul.mubr.bf16.gmra.mxu0 %v353
      %v516 = vpop.f32.mrf.mxu0
      %v517 = vadd.f32 %v331, %v516
      %v518 = vpop.f32.mrf.mxu0
      %v519 = vpop.f32.mrf.mxu0
      %v520 = vadd.f32 %v331, %v519
      %v521 = vpop.f32.mrf.mxu0
      %522 = vmatprep.mubr.bf16.mxu0 0
      %523 = vmatmul.mubr.bf16.gmra.mxu0 %v356
      %v524 = vpop.f32.mrf.mxu0
      %v525 = vadd.f32 %v331, %v524
      %v526 = vpop.f32.mrf.mxu0
      %v527 = vpop.f32.mrf.mxu0
      %v528 = vadd.f32 %v331, %v527
      %v529 = vpop.f32.mrf.mxu0
      %530 = vmatprep.mubr.bf16.mxu0 0
      %531 = vmatmul.mubr.bf16.gmra.mxu0 %v359
      %v532 = vpop.f32.mrf.mxu0
      %v533 = vadd.f32 %v331, %v532
      %v534 = vpop.f32.mrf.mxu0
      %v535 = vpop.f32.mrf.mxu0
      %v536 = vadd.f32 %v331, %v535
      %v537 = vpop.f32.mrf.mxu0
      %538 = vmatprep.mubr.bf16.mxu0 0
      %539 = vmatmul.mubr.bf16.gmra.mxu0 %v362
      %v540 = vpop.f32.mrf.mxu0
      %v541 = vadd.f32 %v331, %v540
      %v542 = vpop.f32.mrf.mxu0
      %v543 = vpop.f32.mrf.mxu0
      %v544 = vadd.f32 %v331, %v543
      %v545 = vpop.f32.mrf.mxu0
      %546 = vmatprep.mubr.bf16.mxu0 0
      %547 = vmatmul.mubr.bf16.gmra.mxu0 %v365
      %v548 = vpop.f32.mrf.mxu0
      %v549 = vadd.f32 %v331, %v548
      %v550 = vpop.f32.mrf.mxu0
      %v551 = vpop.f32.mrf.mxu0
      %v552 = vadd.f32 %v331, %v551
      %v553 = vpop.f32.mrf.mxu0
      %554 = vmatprep.mubr.bf16.mxu0 0
      %555 = vmatmul.mubr.bf16.gmra.mxu0 %v368
      %v556 = vpop.f32.mrf.mxu0
      %v557 = vadd.f32 %v331, %v556
      %v558 = vpop.f32.mrf.mxu0
      %v559 = vpop.f32.mrf.mxu0
      %v560 = vadd.f32 %v331, %v559
      %v561 = vpop.f32.mrf.mxu0
      %562 = vmatprep.mubr.bf16.mxu0 0
      %563 = vmatmul.mubr.bf16.gmra.mxu0 %v371
      %v564 = vpop.f32.mrf.mxu0
      %v565 = vadd.f32 %v331, %v564
      %v566 = vpop.f32.mrf.mxu0
      %v567 = vpop.f32.mrf.mxu0
      %v568 = vadd.f32 %v331, %v567
      %v569 = vpop.f32.mrf.mxu0
      %570 = vmatprep.mubr.bf16.mxu0 0
      %571 = vmatmul.mubr.bf16.gmra.mxu0 %v374
      %v572 = vpop.f32.mrf.mxu0
      %v573 = vadd.f32 %v331, %v572
      %v574 = vpop.f32.mrf.mxu0
      %v575 = vpop.f32.mrf.mxu0
      %v576 = vadd.f32 %v331, %v575
      %v577 = vpop.f32.mrf.mxu0
      %578 = vmatprep.mubr.bf16.mxu0 0
      %579 = vmatmul.mubr.bf16.gmra.mxu0 %v377
      %v580 = vpop.f32.mrf.mxu0
      %v581 = vadd.f32 %v331, %v580
      %v582 = vpop.f32.mrf.mxu0
      %v583 = vpop.f32.mrf.mxu0
      %v584 = vadd.f32 %v331, %v583
      %v585 = vpop.f32.mrf.mxu0
      %586 = vmatprep.mubr.bf16.mxu0 0
      %587 = vmatmul.mubr.bf16.gmra.mxu0 %v380
      %v588 = vpop.f32.mrf.mxu0
      %v589 = vadd.f32 %v331, %v588
      %v590 = vpop.f32.mrf.mxu0
      %v591 = vpop.f32.mrf.mxu0
      %v592 = vadd.f32 %v331, %v591
      %v593 = vpop.f32.mrf.mxu0
      %594 = vmatprep.mubr.bf16.mxu0 0
      %595 = vmatmul.mubr.bf16.gmra.mxu0 %v383
      %v596 = vpop.f32.mrf.mxu0
      %v597 = vadd.f32 %v331, %v596
      %v598 = vpop.f32.mrf.mxu0
      %v599 = vpop.f32.mrf.mxu0
      %v600 = vadd.f32 %v331, %v599
      %v601 = vpop.f32.mrf.mxu0
      %602 = vmatprep.mubr.bf16.mxu0 0
      %603 = vmatmul.mubr.bf16.gmra.mxu0 %v386
      %v604 = vpop.f32.mrf.mxu0
      %v605 = vadd.f32 %v331, %v604
      %v606 = vpop.f32.mrf.mxu0
      %v607 = vpop.f32.mrf.mxu0
      %v608 = vadd.f32 %v331, %v607
      %v609 = vpop.f32.mrf.mxu0
      %610 = vmatprep.mubr.bf16.mxu0 0
      %611 = vmatmul.mubr.bf16.gmra.mxu0 %v389
      %v612 = vpop.f32.mrf.mxu0
      %v613 = vadd.f32 %v331, %v612
      %v614 = vpop.f32.mrf.mxu0
      %v615 = vpop.f32.mrf.mxu0
      %v616 = vadd.f32 %v331, %v615
      %v617 = vpop.f32.mrf.mxu0
      %618 = vmatprep.mubr.bf16.mxu0 0
      %619 = vmatmul.mubr.bf16.gmra.mxu0 %v392
      %v620 = vpop.f32.mrf.mxu0
      %v621 = vadd.f32 %v331, %v620
      %v622 = vpop.f32.mrf.mxu0
      %v623 = vpop.f32.mrf.mxu0
      %v624 = vadd.f32 %v331, %v623
      %v625 = vpop.f32.mrf.mxu0
      %626 = vmatprep.mubr.bf16.mxu0 0
      %627 = vmatmul.mubr.bf16.gmra.mxu0 %v395
      %v628 = vpop.f32.mrf.mxu0
      %v629 = vadd.f32 %v331, %v628
      %v630 = vpop.f32.mrf.mxu0
      %v631 = vpop.f32.mrf.mxu0
      %v632 = vadd.f32 %v331, %v631
      %v633 = vpop.f32.mrf.mxu0
      %634 = vmatprep.mubr.bf16.mxu0 0
      %635 = vmatmul.mubr.bf16.gmra.mxu0 %v398
      %v636 = vpop.f32.mrf.mxu0
      %v637 = vadd.f32 %v331, %v636
      %v638 = vpop.f32.mrf.mxu0
      %v639 = vpop.f32.mrf.mxu0
      %v640 = vadd.f32 %v331, %v639
      %v641 = vpop.f32.mrf.mxu0
      %642 = vmatprep.mubr.bf16.mxu0 0
      %643 = vmatmul.mubr.bf16.gmra.mxu0 %v401
      %v644 = vpop.f32.mrf.mxu0
      %v645 = vadd.f32 %v331, %v644
      %v646 = vpop.f32.mrf.mxu0
      %v647 = vpop.f32.mrf.mxu0
      %v648 = vadd.f32 %v331, %v647
      %v649 = vpop.f32.mrf.mxu0
      %650 = vmatprep.mubr.bf16.mxu0 0
      %651 = vmatmul.mubr.bf16.gmra.mxu0 %v404
      %v652 = vpop.f32.mrf.mxu0
      %v653 = vadd.f32 %v331, %v652
      %v654 = vpop.f32.mrf.mxu0
      %v655 = vpop.f32.mrf.mxu0
      %v656 = vadd.f32 %v331, %v655
      %v657 = vpop.f32.mrf.mxu0
      %658 = vmatprep.mubr.bf16.mxu0 0
      %659 = vmatmul.mubr.bf16.gmra.mxu0 %v407
      %v660 = vpop.f32.mrf.mxu0
      %v661 = vadd.f32 %v331, %v660
      %v662 = vpop.f32.mrf.mxu0
      %v663 = vpop.f32.mrf.mxu0
      %v664 = vadd.f32 %v331, %v663
      %v665 = vpop.f32.mrf.mxu0
      %666 = vmatprep.mubr.bf16.mxu0 0
      %667 = vmatmul.mubr.bf16.gmra.mxu0 %v410
      %v668 = vpop.f32.mrf.mxu0
      %v669 = vadd.f32 %v331, %v668
      %v670 = vpop.f32.mrf.mxu0
      %v671 = vpop.f32.mrf.mxu0
      %v672 = vadd.f32 %v331, %v671
      %v673 = vpop.f32.mrf.mxu0
      %674 = vmatprep.mubr.bf16.mxu0 0
      %675 = vmatmul.mubr.bf16.gmra.mxu0 %v413
      %v676 = vpop.f32.mrf.mxu0
      %v677 = vadd.f32 %v331, %v676
      %v678 = vpop.f32.mrf.mxu0
      %v679 = vpop.f32.mrf.mxu0
      %v680 = vadd.f32 %v331, %v679
      %v681 = vpop.f32.mrf.mxu0
      %682 = vmatprep.mubr.bf16.mxu0 0
      %683 = vmatmul.mubr.bf16.gmra.mxu0 %v416
      %v684 = vpop.f32.mrf.mxu0
      %v685 = vadd.f32 %v331, %v684
      %v686 = vpop.f32.mrf.mxu0
      %v687 = vpop.f32.mrf.mxu0
      %v688 = vadd.f32 %v331, %v687
      %v689 = vpop.f32.mrf.mxu0
      %690 = vmatprep.mubr.bf16.mxu0 0
      %691 = vmatmul.mubr.bf16.gmra.mxu0 %v419
      %v692 = vpop.f32.mrf.mxu0
      %v693 = vadd.f32 %v331, %v692
      %v694 = vpop.f32.mrf.mxu0
      %v695 = vpop.f32.mrf.mxu0
      %v696 = vadd.f32 %v331, %v695
      %v697 = vpop.f32.mrf.mxu0
      %698 = vmatprep.mubr.bf16.mxu0 0
      %699 = vmatmul.mubr.bf16.gmra.mxu0 %v422
      %v700 = vpop.f32.mrf.mxu0
      %v701 = vadd.f32 %v331, %v700
      %v702 = vpop.f32.mrf.mxu0
      %v703 = vpop.f32.mrf.mxu0
      %v704 = vadd.f32 %v331, %v703
      %v705 = vpop.f32.mrf.mxu0
      %706 = vmatprep.mubr.bf16.mxu0 0
      %707 = vmatmul.mubr.bf16.gmra.mxu0 %v425
      %v708 = vpop.f32.mrf.mxu0
      %v709 = vadd.f32 %v331, %v708
      %v710 = vpop.f32.mrf.mxu0
      %v711 = vpop.f32.mrf.mxu0
      %v712 = vadd.f32 %v331, %v711
      %v713 = vpop.f32.mrf.mxu0
      %714 = vmatprep.mubr.bf16.mxu0 0
      %715 = vmatmul.mubr.bf16.gmra.mxu0 %v428
      %v716 = vpop.f32.mrf.mxu0
      %v717 = vadd.f32 %v331, %v716
      %v718 = vpop.f32.mrf.mxu0
      %v719 = vpop.f32.mrf.mxu0
      %v720 = vadd.f32 %v331, %v719
      %v721 = vpop.f32.mrf.mxu0
      %722 = vdwg.mxu0
      %v723 = vmul.f32 %v469, 0.5
      %v724 = vmul.f32 %v472, 0.5
      %v725 = vmul.f32 %v477, 0.5
      %v726 = vmul.f32 %v480, 0.5
      %v727 = vmul.f32 %v485, 0.5
      %v728 = vmul.f32 %v488, 0.5
      %v729 = vmul.f32 %v493, 0.5
      %v730 = vmul.f32 %v496, 0.5
      %v731 = vmul.f32 %v501, 0.5
      %v732 = vmul.f32 %v504, 0.5
      %v733 = vmul.f32 %v509, 0.5
      %v734 = vmul.f32 %v512, 0.5
      %v735 = vmul.f32 %v517, 0.5
      %v736 = vmul.f32 %v520, 0.5
      %v737 = vmul.f32 %v525, 0.5
      %v738 = vmul.f32 %v528, 0.5
      %v739 = vmul.f32 %v533, 0.5
      %v740 = vmul.f32 %v536, 0.5
      %v741 = vmul.f32 %v541, 0.5
      %v742 = vmul.f32 %v544, 0.5
      %v743 = vmul.f32 %v549, 0.5
      %v744 = vmul.f32 %v552, 0.5
      %v745 = vmul.f32 %v557, 0.5
      %v746 = vmul.f32 %v560, 0.5
      %v747 = vmul.f32 %v565, 0.5
      %v748 = vmul.f32 %v568, 0.5
      %v749 = vmul.f32 %v573, 0.5
      %v750 = vmul.f32 %v576, 0.5
      %v751 = vmul.f32 %v581, 0.5
      %v752 = vmul.f32 %v584, 0.5
      %v753 = vmul.f32 %v589, 0.5
      %v754 = vmul.f32 %v592, 0.5
      %v755 = vmul.f32 %v597, 0.5
      %v756 = vmul.f32 %v600, 0.5
      %v757 = vmul.f32 %v605, 0.5
      %v758 = vmul.f32 %v608, 0.5
      %v759 = vmul.f32 %v613, 0.5
      %v760 = vmul.f32 %v616, 0.5
      %v761 = vmul.f32 %v621, 0.5
      %v762 = vmul.f32 %v624, 0.5
      %v763 = vmul.f32 %v629, 0.5
      %v764 = vmul.f32 %v632, 0.5
      %v765 = vmul.f32 %v637, 0.5
      %v766 = vmul.f32 %v640, 0.5
      %v767 = vmul.f32 %v645, 0.5
      %v768 = vmul.f32 %v648, 0.5
      %v769 = vmul.f32 %v653, 0.5
      %v770 = vmul.f32 %v656, 0.5
      %v771 = vmul.f32 %v661, 0.5
      %v772 = vmul.f32 %v664, 0.5
      %v773 = vmul.f32 %v669, 0.5
      %v774 = vmul.f32 %v672, 0.5
      %v775 = vmul.f32 %v677, 0.5
      %v776 = vmul.f32 %v680, 0.5
      %v777 = vmul.f32 %v685, 0.5
      %v778 = vmul.f32 %v688, 0.5
      %v779 = vmul.f32 %v693, 0.5
      %v780 = vmul.f32 %v696, 0.5
      %v781 = vmul.f32 %v701, 0.5
      %v782 = vmul.f32 %v704, 0.5
      %v783 = vmul.f32 %v709, 0.5
      %v784 = vmul.f32 %v712, 0.5
      %v785 = vmul.f32 %v717, 0.5
      %v786 = vmul.f32 %v720, 0.5
      %v787 = vmul.f32 %v469, 0.044715
      %v788 = vmul.f32 %v472, 0.044715
      %v789 = vmul.f32 %v477, 0.044715
      %v790 = vmul.f32 %v480, 0.044715
      %v791 = vmul.f32 %v485, 0.044715
      %v792 = vmul.f32 %v488, 0.044715
      %v793 = vmul.f32 %v493, 0.044715
      %v794 = vmul.f32 %v496, 0.044715
      %v795 = vmul.f32 %v501, 0.044715
      %v796 = vmul.f32 %v504, 0.044715
      %v797 = vmul.f32 %v509, 0.044715
      %v798 = vmul.f32 %v512, 0.044715
      %v799 = vmul.f32 %v517, 0.044715
      %v800 = vmul.f32 %v520, 0.044715
      %v801 = vmul.f32 %v525, 0.044715
      %v802 = vmul.f32 %v528, 0.044715
      %v803 = vmul.f32 %v533, 0.044715
      %v804 = vmul.f32 %v536, 0.044715
      %v805 = vmul.f32 %v541, 0.044715
      %v806 = vmul.f32 %v544, 0.044715
      %v807 = vmul.f32 %v549, 0.044715
      %v808 = vmul.f32 %v552, 0.044715
      %v809 = vmul.f32 %v557, 0.044715
      %v810 = vmul.f32 %v560, 0.044715
      %v811 = vmul.f32 %v565, 0.044715
      %v812 = vmul.f32 %v568, 0.044715
      %v813 = vmul.f32 %v573, 0.044715
      %v814 = vmul.f32 %v576, 0.044715
      %v815 = vmul.f32 %v581, 0.044715
      %v816 = vmul.f32 %v584, 0.044715
      %v817 = vmul.f32 %v589, 0.044715
      %v818 = vmul.f32 %v592, 0.044715
      %v819 = vmul.f32 %v597, 0.044715
      %v820 = vmul.f32 %v600, 0.044715
      %v821 = vmul.f32 %v605, 0.044715
      %v822 = vmul.f32 %v608, 0.044715
      %v823 = vmul.f32 %v613, 0.044715
      %v824 = vmul.f32 %v616, 0.044715
      %v825 = vmul.f32 %v621, 0.044715
      %v826 = vmul.f32 %v624, 0.044715
      %v827 = vmul.f32 %v629, 0.044715
      %v828 = vmul.f32 %v632, 0.044715
      %v829 = vmul.f32 %v637, 0.044715
      %v830 = vmul.f32 %v640, 0.044715
      %v831 = vmul.f32 %v645, 0.044715
      %v832 = vmul.f32 %v648, 0.044715
      %v833 = vmul.f32 %v653, 0.044715
      %v834 = vmul.f32 %v656, 0.044715
      %v835 = vmul.f32 %v661, 0.044715
      %v836 = vmul.f32 %v664, 0.044715
      %v837 = vmul.f32 %v669, 0.044715
      %v838 = vmul.f32 %v672, 0.044715
      %v839 = vmul.f32 %v677, 0.044715
      %v840 = vmul.f32 %v680, 0.044715
      %v841 = vmul.f32 %v685, 0.044715
      %v842 = vmul.f32 %v688, 0.044715
      %v843 = vmul.f32 %v693, 0.044715
      %v844 = vmul.f32 %v696, 0.044715
      %v845 = vmul.f32 %v701, 0.044715
      %v846 = vmul.f32 %v704, 0.044715
      %v847 = vmul.f32 %v709, 0.044715
      %v848 = vmul.f32 %v712, 0.044715
      %v849 = vmul.f32 %v717, 0.044715
      %v850 = vmul.f32 %v720, 0.044715
      %v851 = vmul.f32 %v787, %v469
      %v852 = vmul.f32 %v788, %v472
      %v853 = vmul.f32 %v789, %v477
      %v854 = vmul.f32 %v790, %v480
      %v855 = vmul.f32 %v791, %v485
      %v856 = vmul.f32 %v792, %v488
      %v857 = vmul.f32 %v793, %v493
      %v858 = vmul.f32 %v794, %v496
      %v859 = vmul.f32 %v795, %v501
      %v860 = vmul.f32 %v796, %v504
      %v861 = vmul.f32 %v797, %v509
      %v862 = vmul.f32 %v798, %v512
      %v863 = vmul.f32 %v799, %v517
      %v864 = vmul.f32 %v800, %v520
      %v865 = vmul.f32 %v801, %v525
      %v866 = vmul.f32 %v802, %v528
      %v867 = vmul.f32 %v803, %v533
      %v868 = vmul.f32 %v804, %v536
      %v869 = vmul.f32 %v805, %v541
      %v870 = vmul.f32 %v806, %v544
      %v871 = vmul.f32 %v807, %v549
      %v872 = vmul.f32 %v808, %v552
      %v873 = vmul.f32 %v809, %v557
      %v874 = vmul.f32 %v810, %v560
      %v875 = vmul.f32 %v811, %v565
      %v876 = vmul.f32 %v812, %v568
      %v877 = vmul.f32 %v813, %v573
      %v878 = vmul.f32 %v814, %v576
      %v879 = vmul.f32 %v815, %v581
      %v880 = vmul.f32 %v816, %v584
      %v881 = vmul.f32 %v817, %v589
      %v882 = vmul.f32 %v818, %v592
      %v883 = vmul.f32 %v819, %v597
      %v884 = vmul.f32 %v820, %v600
      %v885 = vmul.f32 %v821, %v605
      %v886 = vmul.f32 %v822, %v608
      %v887 = vmul.f32 %v823, %v613
      %v888 = vmul.f32 %v824, %v616
      %v889 = vmul.f32 %v825, %v621
      %v890 = vmul.f32 %v826, %v624
      %v891 = vmul.f32 %v827, %v629
      %v892 = vmul.f32 %v828, %v632
      %v893 = vmul.f32 %v829, %v637
      %v894 = vmul.f32 %v830, %v640
      %v895 = vmul.f32 %v831, %v645
      %v896 = vmul.f32 %v832, %v648
      %v897 = vmul.f32 %v833, %v653
      %v898 = vmul.f32 %v834, %v656
      %v899 = vmul.f32 %v835, %v661
      %v900 = vmul.f32 %v836, %v664
      %v901 = vmul.f32 %v837, %v669
      %v902 = vmul.f32 %v838, %v672
      %v903 = vmul.f32 %v839, %v677
      %v904 = vmul.f32 %v840, %v680
      %v905 = vmul.f32 %v841, %v685
      %v906 = vmul.f32 %v842, %v688
      %v907 = vmul.f32 %v843, %v693
      %v908 = vmul.f32 %v844, %v696
      %v909 = vmul.f32 %v845, %v701
      %v910 = vmul.f32 %v846, %v704
      %v911 = vmul.f32 %v847, %v709
      %v912 = vmul.f32 %v848, %v712
      %v913 = vmul.f32 %v849, %v717
      %v914 = vmul.f32 %v850, %v720
      %v915 = vmul.f32 %v851, %v469
      %v916 = vmul.f32 %v852, %v472
      %v917 = vmul.f32 %v853, %v477
      %v918 = vmul.f32 %v854, %v480
      %v919 = vmul.f32 %v855, %v485
      %v920 = vmul.f32 %v856, %v488
      %v921 = vmul.f32 %v857, %v493
      %v922 = vmul.f32 %v858, %v496
      %v923 = vmul.f32 %v859, %v501
      %v924 = vmul.f32 %v860, %v504
      %v925 = vmul.f32 %v861, %v509
      %v926 = vmul.f32 %v862, %v512
      %v927 = vmul.f32 %v863, %v517
      %v928 = vmul.f32 %v864, %v520
      %v929 = vmul.f32 %v865, %v525
      %v930 = vmul.f32 %v866, %v528
      %v931 = vmul.f32 %v867, %v533
      %v932 = vmul.f32 %v868, %v536
      %v933 = vmul.f32 %v869, %v541
      %v934 = vmul.f32 %v870, %v544
      %v935 = vmul.f32 %v871, %v549
      %v936 = vmul.f32 %v872, %v552
      %v937 = vmul.f32 %v873, %v557
      %v938 = vmul.f32 %v874, %v560
      %v939 = vmul.f32 %v875, %v565
      %v940 = vmul.f32 %v876, %v568
      %v941 = vmul.f32 %v877, %v573
      %v942 = vmul.f32 %v878, %v576
      %v943 = vmul.f32 %v879, %v581
      %v944 = vmul.f32 %v880, %v584
      %v945 = vmul.f32 %v881, %v589
      %v946 = vmul.f32 %v882, %v592
      %v947 = vmul.f32 %v883, %v597
      %v948 = vmul.f32 %v884, %v600
      %v949 = vmul.f32 %v885, %v605
      %v950 = vmul.f32 %v886, %v608
      %v951 = vmul.f32 %v887, %v613
      %v952 = vmul.f32 %v888, %v616
      %v953 = vmul.f32 %v889, %v621
      %v954 = vmul.f32 %v890, %v624
      %v955 = vmul.f32 %v891, %v629
      %v956 = vmul.f32 %v892, %v632
      %v957 = vmul.f32 %v893, %v637
      %v958 = vmul.f32 %v894, %v640
      %v959 = vmul.f32 %v895, %v645
      %v960 = vmul.f32 %v896, %v648
      %v961 = vmul.f32 %v897, %v653
      %v962 = vmul.f32 %v898, %v656
      %v963 = vmul.f32 %v899, %v661
      %v964 = vmul.f32 %v900, %v664
      %v965 = vmul.f32 %v901, %v669
      %v966 = vmul.f32 %v902, %v672
      %v967 = vmul.f32 %v903, %v677
      %v968 = vmul.f32 %v904, %v680
      %v969 = vmul.f32 %v905, %v685
      %v970 = vmul.f32 %v906, %v688
      %v971 = vmul.f32 %v907, %v693
      %v972 = vmul.f32 %v908, %v696
      %v973 = vmul.f32 %v909, %v701
      %v974 = vmul.f32 %v910, %v704
      %v975 = vmul.f32 %v911, %v709
      %v976 = vmul.f32 %v912, %v712
      %v977 = vmul.f32 %v913, %v717
      %v978 = vmul.f32 %v914, %v720
      %v979 = vadd.f32 %v469, %v915
      %v980 = vadd.f32 %v472, %v916
      %v981 = vadd.f32 %v477, %v917
      %v982 = vadd.f32 %v480, %v918
      %v983 = vadd.f32 %v485, %v919
      %v984 = vadd.f32 %v488, %v920
      %v985 = vadd.f32 %v493, %v921
      %v986 = vadd.f32 %v496, %v922
      %v987 = vadd.f32 %v501, %v923
      %v988 = vadd.f32 %v504, %v924
      %v989 = vadd.f32 %v509, %v925
      %v990 = vadd.f32 %v512, %v926
      %v991 = vadd.f32 %v517, %v927
      %v992 = vadd.f32 %v520, %v928
      %v993 = vadd.f32 %v525, %v929
      %v994 = vadd.f32 %v528, %v930
      %v995 = vadd.f32 %v533, %v931
      %v996 = vadd.f32 %v536, %v932
      %v997 = vadd.f32 %v541, %v933
      %v998 = vadd.f32 %v544, %v934
      %v999 = vadd.f32 %v549, %v935
      %v1000 = vadd.f32 %v552, %v936
      %v1001 = vadd.f32 %v557, %v937
      %v1002 = vadd.f32 %v560, %v938
      %v1003 = vadd.f32 %v565, %v939
      %v1004 = vadd.f32 %v568, %v940
      %v1005 = vadd.f32 %v573, %v941
      %v1006 = vadd.f32 %v576, %v942
      %v1007 = vadd.f32 %v581, %v943
      %v1008 = vadd.f32 %v584, %v944
      %v1009 = vadd.f32 %v589, %v945
      %v1010 = vadd.f32 %v592, %v946
      %v1011 = vadd.f32 %v597, %v947
      %v1012 = vadd.f32 %v600, %v948
      %v1013 = vadd.f32 %v605, %v949
      %v1014 = vadd.f32 %v608, %v950
      %v1015 = vadd.f32 %v613, %v951
      %v1016 = vadd.f32 %v616, %v952
      %v1017 = vadd.f32 %v621, %v953
      %v1018 = vadd.f32 %v624, %v954
      %v1019 = vadd.f32 %v629, %v955
      %v1020 = vadd.f32 %v632, %v956
      %v1021 = vadd.f32 %v637, %v957
      %v1022 = vadd.f32 %v640, %v958
      %v1023 = vadd.f32 %v645, %v959
      %v1024 = vadd.f32 %v648, %v960
      %v1025 = vadd.f32 %v653, %v961
      %v1026 = vadd.f32 %v656, %v962
      %v1027 = vadd.f32 %v661, %v963
      %v1028 = vadd.f32 %v664, %v964
      %v1029 = vadd.f32 %v669, %v965
      %v1030 = vadd.f32 %v672, %v966
      %v1031 = vadd.f32 %v677, %v967
      %v1032 = vadd.f32 %v680, %v968
      %v1033 = vadd.f32 %v685, %v969
      %v1034 = vadd.f32 %v688, %v970
      %v1035 = vadd.f32 %v693, %v971
      %v1036 = vadd.f32 %v696, %v972
      %v1037 = vadd.f32 %v701, %v973
      %v1038 = vadd.f32 %v704, %v974
      %v1039 = vadd.f32 %v709, %v975
      %v1040 = vadd.f32 %v712, %v976
      %v1041 = vadd.f32 %v717, %v977
      %v1042 = vadd.f32 %v720, %v978
      %v1043 = vmul.f32 %v979, 0.7978846
      %v1044 = vmul.f32 %v980, 0.7978846
      %v1045 = vmul.f32 %v981, 0.7978846
      %v1046 = vmul.f32 %v982, 0.7978846
      %v1047 = vmul.f32 %v983, 0.7978846
      %v1048 = vmul.f32 %v984, 0.7978846
      %v1049 = vmul.f32 %v985, 0.7978846
      %v1050 = vmul.f32 %v986, 0.7978846
      %v1051 = vmul.f32 %v987, 0.7978846
      %v1052 = vmul.f32 %v988, 0.7978846
      %v1053 = vmul.f32 %v989, 0.7978846
      %v1054 = vmul.f32 %v990, 0.7978846
      %v1055 = vmul.f32 %v991, 0.7978846
      %v1056 = vmul.f32 %v992, 0.7978846
      %v1057 = vmul.f32 %v993, 0.7978846
      %v1058 = vmul.f32 %v994, 0.7978846
      %v1059 = vmul.f32 %v995, 0.7978846
      %v1060 = vmul.f32 %v996, 0.7978846
      %v1061 = vmul.f32 %v997, 0.7978846
      %v1062 = vmul.f32 %v998, 0.7978846
      %v1063 = vmul.f32 %v999, 0.7978846
      %v1064 = vmul.f32 %v1000, 0.7978846
      %v1065 = vmul.f32 %v1001, 0.7978846
      %v1066 = vmul.f32 %v1002, 0.7978846
      %v1067 = vmul.f32 %v1003, 0.7978846
      %v1068 = vmul.f32 %v1004, 0.7978846
      %v1069 = vmul.f32 %v1005, 0.7978846
      %v1070 = vmul.f32 %v1006, 0.7978846
      %v1071 = vmul.f32 %v1007, 0.7978846
      %v1072 = vmul.f32 %v1008, 0.7978846
      %v1073 = vmul.f32 %v1009, 0.7978846
      %v1074 = vmul.f32 %v1010, 0.7978846
      %v1075 = vmul.f32 %v1011, 0.7978846
      %v1076 = vmul.f32 %v1012, 0.7978846
      %v1077 = vmul.f32 %v1013, 0.7978846
      %v1078 = vmul.f32 %v1014, 0.7978846
      %v1079 = vmul.f32 %v1015, 0.7978846
      %v1080 = vmul.f32 %v1016, 0.7978846
      %v1081 = vmul.f32 %v1017, 0.7978846
      %v1082 = vmul.f32 %v1018, 0.7978846
      %v1083 = vmul.f32 %v1019, 0.7978846
      %v1084 = vmul.f32 %v1020, 0.7978846
      %v1085 = vmul.f32 %v1021, 0.7978846
      %v1086 = vmul.f32 %v1022, 0.7978846
      %v1087 = vmul.f32 %v1023, 0.7978846
      %v1088 = vmul.f32 %v1024, 0.7978846
      %v1089 = vmul.f32 %v1025, 0.7978846
      %v1090 = vmul.f32 %v1026, 0.7978846
      %v1091 = vmul.f32 %v1027, 0.7978846
      %v1092 = vmul.f32 %v1028, 0.7978846
      %v1093 = vmul.f32 %v1029, 0.7978846
      %v1094 = vmul.f32 %v1030, 0.7978846
      %v1095 = vmul.f32 %v1031, 0.7978846
      %v1096 = vmul.f32 %v1032, 0.7978846
      %v1097 = vmul.f32 %v1033, 0.7978846
      %v1098 = vmul.f32 %v1034, 0.7978846
      %v1099 = vmul.f32 %v1035, 0.7978846
      %v1100 = vmul.f32 %v1036, 0.7978846
      %v1101 = vmul.f32 %v1037, 0.7978846
      %v1102 = vmul.f32 %v1038, 0.7978846
      %v1103 = vmul.f32 %v1039, 0.7978846
      %v1104 = vmul.f32 %v1040, 0.7978846
      %v1105 = vmul.f32 %v1041, 0.7978846
      %v1106 = vmul.f32 %v1042, 0.7978846
      %v1107 = vtanh.pop %v1043
      %v1108 = vtanh.pop %v1044
      %v1109 = vtanh.pop %v1045
      %v1110 = vtanh.pop %v1046
      %v1111 = vtanh.pop %v1047
      %v1112 = vtanh.pop %v1048
      %v1113 = vtanh.pop %v1049
      %v1114 = vtanh.pop %v1050
      %v1115 = vtanh.pop %v1051
      %v1116 = vtanh.pop %v1052
      %v1117 = vtanh.pop %v1053
      %v1118 = vtanh.pop %v1054
      %v1119 = vtanh.pop %v1055
      %v1120 = vtanh.pop %v1056
      %v1121 = vtanh.pop %v1057
      %v1122 = vtanh.pop %v1058
      %v1123 = vtanh.pop %v1059
      %v1124 = vtanh.pop %v1060
      %v1125 = vtanh.pop %v1061
      %v1126 = vtanh.pop %v1062
      %v1127 = vtanh.pop %v1063
      %v1128 = vtanh.pop %v1064
      %v1129 = vtanh.pop %v1065
      %v1130 = vtanh.pop %v1066
      %v1131 = vtanh.pop %v1067
      %v1132 = vtanh.pop %v1068
      %v1133 = vtanh.pop %v1069
      %v1134 = vtanh.pop %v1070
      %v1135 = vtanh.pop %v1071
      %v1136 = vtanh.pop %v1072
      %v1137 = vtanh.pop %v1073
      %v1138 = vtanh.pop %v1074
      %v1139 = vtanh.pop %v1075
      %v1140 = vtanh.pop %v1076
      %v1141 = vtanh.pop %v1077
      %v1142 = vtanh.pop %v1078
      %v1143 = vtanh.pop %v1079
      %v1144 = vtanh.pop %v1080
      %v1145 = vtanh.pop %v1081
      %v1146 = vtanh.pop %v1082
      %v1147 = vtanh.pop %v1083
      %v1148 = vtanh.pop %v1084
      %v1149 = vtanh.pop %v1085
      %v1150 = vtanh.pop %v1086
      %v1151 = vtanh.pop %v1087
      %v1152 = vtanh.pop %v1088
      %v1153 = vtanh.pop %v1089
      %v1154 = vtanh.pop %v1090
      %v1155 = vtanh.pop %v1091
      %v1156 = vtanh.pop %v1092
      %v1157 = vtanh.pop %v1093
      %v1158 = vtanh.pop %v1094
      %v1159 = vtanh.pop %v1095
      %v1160 = vtanh.pop %v1096
      %v1161 = vtanh.pop %v1097
      %v1162 = vtanh.pop %v1098
      %v1163 = vtanh.pop %v1099
      %v1164 = vtanh.pop %v1100
      %v1165 = vtanh.pop %v1101
      %v1166 = vtanh.pop %v1102
      %v1167 = vtanh.pop %v1103
      %v1168 = vtanh.pop %v1104
      %v1169 = vtanh.pop %v1105
      %v1170 = vtanh.pop %v1106
      %v1171 = vadd.f32 %v1107, 1.0
      %v1172 = vadd.f32 %v1108, 1.0
      %v1173 = vadd.f32 %v1109, 1.0
      %v1174 = vadd.f32 %v1110, 1.0
      %v1175 = vadd.f32 %v1111, 1.0
      %v1176 = vadd.f32 %v1112, 1.0
      %v1177 = vadd.f32 %v1113, 1.0
      %v1178 = vadd.f32 %v1114, 1.0
      %v1179 = vadd.f32 %v1115, 1.0
      %v1180 = vadd.f32 %v1116, 1.0
      %v1181 = vadd.f32 %v1117, 1.0
      %v1182 = vadd.f32 %v1118, 1.0
      %v1183 = vadd.f32 %v1119, 1.0
      %v1184 = vadd.f32 %v1120, 1.0
      %v1185 = vadd.f32 %v1121, 1.0
      %v1186 = vadd.f32 %v1122, 1.0
      %v1187 = vadd.f32 %v1123, 1.0
      %v1188 = vadd.f32 %v1124, 1.0
      %v1189 = vadd.f32 %v1125, 1.0
      %v1190 = vadd.f32 %v1126, 1.0
      %v1191 = vadd.f32 %v1127, 1.0
      %v1192 = vadd.f32 %v1128, 1.0
      %v1193 = vadd.f32 %v1129, 1.0
      %v1194 = vadd.f32 %v1130, 1.0
      %v1195 = vadd.f32 %v1131, 1.0
      %v1196 = vadd.f32 %v1132, 1.0
      %v1197 = vadd.f32 %v1133, 1.0
      %v1198 = vadd.f32 %v1134, 1.0
      %v1199 = vadd.f32 %v1135, 1.0
      %v1200 = vadd.f32 %v1136, 1.0
      %v1201 = vadd.f32 %v1137, 1.0
      %v1202 = vadd.f32 %v1138, 1.0
      %v1203 = vadd.f32 %v1139, 1.0
      %v1204 = vadd.f32 %v1140, 1.0
      %v1205 = vadd.f32 %v1141, 1.0
      %v1206 = vadd.f32 %v1142, 1.0
      %v1207 = vadd.f32 %v1143, 1.0
      %v1208 = vadd.f32 %v1144, 1.0
      %v1209 = vadd.f32 %v1145, 1.0
      %v1210 = vadd.f32 %v1146, 1.0
      %v1211 = vadd.f32 %v1147, 1.0
      %v1212 = vadd.f32 %v1148, 1.0
      %v1213 = vadd.f32 %v1149, 1.0
      %v1214 = vadd.f32 %v1150, 1.0
      %v1215 = vadd.f32 %v1151, 1.0
      %v1216 = vadd.f32 %v1152, 1.0
      %v1217 = vadd.f32 %v1153, 1.0
      %v1218 = vadd.f32 %v1154, 1.0
      %v1219 = vadd.f32 %v1155, 1.0
      %v1220 = vadd.f32 %v1156, 1.0
      %v1221 = vadd.f32 %v1157, 1.0
      %v1222 = vadd.f32 %v1158, 1.0
      %v1223 = vadd.f32 %v1159, 1.0
      %v1224 = vadd.f32 %v1160, 1.0
      %v1225 = vadd.f32 %v1161, 1.0
      %v1226 = vadd.f32 %v1162, 1.0
      %v1227 = vadd.f32 %v1163, 1.0
      %v1228 = vadd.f32 %v1164, 1.0
      %v1229 = vadd.f32 %v1165, 1.0
      %v1230 = vadd.f32 %v1166, 1.0
      %v1231 = vadd.f32 %v1167, 1.0
      %v1232 = vadd.f32 %v1168, 1.0
      %v1233 = vadd.f32 %v1169, 1.0
      %v1234 = vadd.f32 %v1170, 1.0
      %v1235 = vmul.f32 %v723, %v1171
      %v1236 = vmul.f32 %v724, %v1172
      %v1237 = vmul.f32 %v725, %v1173
      %v1238 = vmul.f32 %v726, %v1174
      %v1239 = vmul.f32 %v727, %v1175
      %v1240 = vmul.f32 %v728, %v1176
      %v1241 = vmul.f32 %v729, %v1177
      %v1242 = vmul.f32 %v730, %v1178
      %v1243 = vmul.f32 %v731, %v1179
      %v1244 = vmul.f32 %v732, %v1180
      %v1245 = vmul.f32 %v733, %v1181
      %v1246 = vmul.f32 %v734, %v1182
      %v1247 = vmul.f32 %v735, %v1183
      %v1248 = vmul.f32 %v736, %v1184
      %v1249 = vmul.f32 %v737, %v1185
      %v1250 = vmul.f32 %v738, %v1186
      %v1251 = vmul.f32 %v739, %v1187
      %v1252 = vmul.f32 %v740, %v1188
      %v1253 = vmul.f32 %v741, %v1189
      %v1254 = vmul.f32 %v742, %v1190
      %v1255 = vmul.f32 %v743, %v1191
      %v1256 = vmul.f32 %v744, %v1192
      %v1257 = vmul.f32 %v745, %v1193
      %v1258 = vmul.f32 %v746, %v1194
      %v1259 = vmul.f32 %v747, %v1195
      %v1260 = vmul.f32 %v748, %v1196
      %v1261 = vmul.f32 %v749, %v1197
      %v1262 = vmul.f32 %v750, %v1198
      %v1263 = vmul.f32 %v751, %v1199
      %v1264 = vmul.f32 %v752, %v1200
      %v1265 = vmul.f32 %v753, %v1201
      %v1266 = vmul.f32 %v754, %v1202
      %v1267 = vmul.f32 %v755, %v1203
      %v1268 = vmul.f32 %v756, %v1204
      %v1269 = vmul.f32 %v757, %v1205
      %v1270 = vmul.f32 %v758, %v1206
      %v1271 = vmul.f32 %v759, %v1207
      %v1272 = vmul.f32 %v760, %v1208
      %v1273 = vmul.f32 %v761, %v1209
      %v1274 = vmul.f32 %v762, %v1210
      %v1275 = vmul.f32 %v763, %v1211
      %v1276 = vmul.f32 %v764, %v1212
      %v1277 = vmul.f32 %v765, %v1213
      %v1278 = vmul.f32 %v766, %v1214
      %v1279 = vmul.f32 %v767, %v1215
      %v1280 = vmul.f32 %v768, %v1216
      %v1281 = vmul.f32 %v769, %v1217
      %v1282 = vmul.f32 %v770, %v1218
      %v1283 = vmul.f32 %v771, %v1219
      %v1284 = vmul.f32 %v772, %v1220
      %v1285 = vmul.f32 %v773, %v1221
      %v1286 = vmul.f32 %v774, %v1222
      %v1287 = vmul.f32 %v775, %v1223
      %v1288 = vmul.f32 %v776, %v1224
      %v1289 = vmul.f32 %v777, %v1225
      %v1290 = vmul.f32 %v778, %v1226
      %v1291 = vmul.f32 %v779, %v1227
      %v1292 = vmul.f32 %v780, %v1228
      %v1293 = vmul.f32 %v781, %v1229
      %v1294 = vmul.f32 %v782, %v1230
      %v1295 = vmul.f32 %v783, %v1231
      %v1296 = vmul.f32 %v784, %v1232
      %v1297 = vmul.f32 %v785, %v1233
      %v1298 = vmul.f32 %v786, %v1234
      %v1299 = vpack.c.bf16 %v1236, %v1235
      %v1300 = vpack.c.bf16 %v1238, %v1237
      %v1301 = vpack.c.bf16 %v1240, %v1239
      %v1302 = vpack.c.bf16 %v1242, %v1241
      %v1303 = vpack.c.bf16 %v1244, %v1243
      %v1304 = vpack.c.bf16 %v1246, %v1245
      %v1305 = vpack.c.bf16 %v1248, %v1247
      %v1306 = vpack.c.bf16 %v1250, %v1249
      %v1307 = vpack.c.bf16 %v1252, %v1251
      %v1308 = vpack.c.bf16 %v1254, %v1253
      %v1309 = vpack.c.bf16 %v1256, %v1255
      %v1310 = vpack.c.bf16 %v1258, %v1257
      %v1311 = vpack.c.bf16 %v1260, %v1259
      %v1312 = vpack.c.bf16 %v1262, %v1261
      %v1313 = vpack.c.bf16 %v1264, %v1263
      %v1314 = vpack.c.bf16 %v1266, %v1265
      %v1315 = vpack.c.bf16 %v1268, %v1267
      %v1316 = vpack.c.bf16 %v1270, %v1269
      %v1317 = vpack.c.bf16 %v1272, %v1271
      %v1318 = vpack.c.bf16 %v1274, %v1273
      %v1319 = vpack.c.bf16 %v1276, %v1275
      %v1320 = vpack.c.bf16 %v1278, %v1277
      %v1321 = vpack.c.bf16 %v1280, %v1279
      %v1322 = vpack.c.bf16 %v1282, %v1281
      %v1323 = vpack.c.bf16 %v1284, %v1283
      %v1324 = vpack.c.bf16 %v1286, %v1285
      %v1325 = vpack.c.bf16 %v1288, %v1287
      %v1326 = vpack.c.bf16 %v1290, %v1289
      %v1327 = vpack.c.bf16 %v1292, %v1291
      %v1328 = vpack.c.bf16 %v1294, %v1293
      %v1329 = vpack.c.bf16 %v1296, %v1295
      %v1330 = vpack.c.bf16 %v1298, %v1297
      %v1331 = vld [vmem:[%s3] sm:$0xf]
      %v1332 = vld [vmem:[%s3 + $0x4] sm:$0xf]
      %v1333 = vld [vmem:[%s3 + $0x8] sm:$0xf]
      %v1334 = vld [vmem:[%s3 + $0xc] sm:$0xf]
      %v1335 = vld [vmem:[%s3 + $0x10] sm:$0xf]
      %v1336 = vld [vmem:[%s3 + $0x14] sm:$0xf]
      %v1337 = vld [vmem:[%s3 + $0x18] sm:$0xf]
      %v1338 = vld [vmem:[%s3 + $0x1c] sm:$0xf]
      %v1339 = vld [vmem:[%s4] sm:$0x1]
      %v1341 = vlaneseq
      %v1342 = vshrl.u32 %v1341, 7
      %v1343 = vsub.s32 0, %v1342
      %v1344 = vrot.slane %v1339, %v1343
      %v1354 = vunpack.c.l.b16 %v1331
      %v1355 = vunpack.c.l.b16 %v1332
      %v1356 = vunpack.c.l.b16 %v1333
      %v1357 = vunpack.c.l.b16 %v1334
      %v1358 = vunpack.c.l.b16 %v1335
      %v1359 = vunpack.c.l.b16 %v1336
      %v1360 = vunpack.c.l.b16 %v1337
      %v1361 = vunpack.c.l.b16 %v1338
      %v1362 = vpack.c.b16 %v1355, %v1354
      %v1363 = vpack.c.b16 %v1357, %v1356
      %v1364 = vpack.c.b16 %v1359, %v1358
      %v1365 = vpack.c.b16 %v1361, %v1360
      %vm1370 = vcmask 523264
      %v1372 = vsel %vm1370, %v1299, 0
      %v1375 = vsel %vm1370, %v1300, 0
      %v1378 = vsel %vm1370, %v1301, 0
      %v1381 = vsel %vm1370, %v1302, 0
      %v1384 = vsel %vm1370, %v1303, 0
      %v1387 = vsel %vm1370, %v1304, 0
      %v1390 = vsel %vm1370, %v1305, 0
      %v1393 = vsel %vm1370, %v1306, 0
      %v1396 = vsel %vm1370, %v1307, 0
      %v1399 = vsel %vm1370, %v1308, 0
      %v1402 = vsel %vm1370, %v1309, 0
      %v1405 = vsel %vm1370, %v1310, 0
      %v1408 = vsel %vm1370, %v1311, 0
      %v1411 = vsel %vm1370, %v1312, 0
      %v1414 = vsel %vm1370, %v1313, 0
      %v1417 = vsel %vm1370, %v1314, 0
      %v1420 = vsel %vm1370, %v1315, 0
      %v1423 = vsel %vm1370, %v1316, 0
      %v1426 = vsel %vm1370, %v1317, 0
      %v1429 = vsel %vm1370, %v1318, 0
      %v1432 = vsel %vm1370, %v1319, 0
      %v1435 = vsel %vm1370, %v1320, 0
      %v1438 = vsel %vm1370, %v1321, 0
      %v1441 = vsel %vm1370, %v1322, 0
      %v1444 = vsel %vm1370, %v1323, 0
      %v1447 = vsel %vm1370, %v1324, 0
      %v1450 = vsel %vm1370, %v1325, 0
      %v1453 = vsel %vm1370, %v1326, 0
      %v1456 = vsel %vm1370, %v1327, 0
      %v1459 = vsel %vm1370, %v1328, 0
      %v1462 = vsel %vm1370, %v1329, 0
      %v1465 = vsel %vm1370, %v1330, 0
      %1467 = vmatprep.subr.bf16.mxu0 0
      %1468 = vmatpush1.bf16.msra.mxu0 0
      %1469 = vmatprep.subr.bf16.mxu0 0
      %1470 = vmatpush1.bf16.msra.mxu0 0
      %1471 = vmatprep.subr.bf16.mxu0 0
      %1472 = vmatpush1.bf16.msra.mxu0 0
      %1473 = vmatprep.subr.bf16.mxu0 0
      %1474 = vmatpush1.bf16.msra.mxu0 0
      %1475 = vmatprep.subr.bf16.mxu0 0
      %1476 = vmatpush1.bf16.msra.mxu0 %v1365
      %1477 = vmatprep.subr.bf16.mxu0 0
      %1478 = vmatpush1.bf16.msra.mxu0 %v1364
      %1479 = vmatprep.subr.bf16.mxu0 0
      %1480 = vmatpush1.bf16.msra.mxu0 %v1363
      %1481 = vmatprep.subr.bf16.mxu0 0
      %1482 = vmatpush1.bf16.msra.mxu0 %v1362
      %1483 = vmatprep.subr.bf16.mxu0 0
      %1484 = vmatpush2.bf16.msra.mxu0 0
      %1485 = vmatprep.subr.bf16.mxu0 0
      %1486 = vmatpush2.bf16.msra.mxu0 0
      %1487 = vmatprep.subr.bf16.mxu0 0
      %1488 = vmatpush2.bf16.msra.mxu0 0
      %1489 = vmatprep.subr.bf16.mxu0 0
      %1490 = vmatpush2.bf16.msra.mxu0 0
      %1491 = vmatprep.subr.bf16.mxu0 0
      %1492 = vmatpush2.bf16.msra.mxu0 0
      %1493 = vmatprep.subr.bf16.mxu0 0
      %1494 = vmatpush2.bf16.msra.mxu0 0
      %1495 = vmatprep.subr.bf16.mxu0 0
      %1496 = vmatpush2.bf16.msra.mxu0 0
      %1497 = vmatprep.subr.bf16.mxu0 0
      %1498 = vmatpush2.bf16.msra.mxu0 0
      %1499 = vmatprep.mubr.bf16.mxu0 0
      %1500 = vmatmul.mubr.bf16.gmra.mxu0 %v1372
      %v1501 = vpop.f32.mrf.mxu0
      %v1502 = vadd.f32 %v1344, %v1501
      %v1503 = vpop.f32.mrf.mxu0
      %v1504 = vpop.f32.mrf.mxu0
      %v1505 = vadd.f32 %v1344, %v1504
      %v1506 = vpop.f32.mrf.mxu0
      %1507 = vmatprep.mubr.bf16.mxu0 0
      %1508 = vmatmul.mubr.bf16.gmra.mxu0 %v1375
      %v1509 = vpop.f32.mrf.mxu0
      %v1510 = vadd.f32 %v1344, %v1509
      %v1511 = vpop.f32.mrf.mxu0
      %v1512 = vpop.f32.mrf.mxu0
      %v1513 = vadd.f32 %v1344, %v1512
      %v1514 = vpop.f32.mrf.mxu0
      %1515 = vmatprep.mubr.bf16.mxu0 0
      %1516 = vmatmul.mubr.bf16.gmra.mxu0 %v1378
      %v1517 = vpop.f32.mrf.mxu0
      %v1518 = vadd.f32 %v1344, %v1517
      %v1519 = vpop.f32.mrf.mxu0
      %v1520 = vpop.f32.mrf.mxu0
      %v1521 = vadd.f32 %v1344, %v1520
      %v1522 = vpop.f32.mrf.mxu0
      %1523 = vmatprep.mubr.bf16.mxu0 0
      %1524 = vmatmul.mubr.bf16.gmra.mxu0 %v1381
      %v1525 = vpop.f32.mrf.mxu0
      %v1526 = vadd.f32 %v1344, %v1525
      %v1527 = vpop.f32.mrf.mxu0
      %v1528 = vpop.f32.mrf.mxu0
      %v1529 = vadd.f32 %v1344, %v1528
      %v1530 = vpop.f32.mrf.mxu0
      %1531 = vmatprep.mubr.bf16.mxu0 0
      %1532 = vmatmul.mubr.bf16.gmra.mxu0 %v1384
      %v1533 = vpop.f32.mrf.mxu0
      %v1534 = vadd.f32 %v1344, %v1533
      %v1535 = vpop.f32.mrf.mxu0
      %v1536 = vpop.f32.mrf.mxu0
      %v1537 = vadd.f32 %v1344, %v1536
      %v1538 = vpop.f32.mrf.mxu0
      %1539 = vmatprep.mubr.bf16.mxu0 0
      %1540 = vmatmul.mubr.bf16.gmra.mxu0 %v1387
      %v1541 = vpop.f32.mrf.mxu0
      %v1542 = vadd.f32 %v1344, %v1541
      %v1543 = vpop.f32.mrf.mxu0
      %v1544 = vpop.f32.mrf.mxu0
      %v1545 = vadd.f32 %v1344, %v1544
      %v1546 = vpop.f32.mrf.mxu0
      %1547 = vmatprep.mubr.bf16.mxu0 0
      %1548 = vmatmul.mubr.bf16.gmra.mxu0 %v1390
      %v1549 = vpop.f32.mrf.mxu0
      %v1550 = vadd.f32 %v1344, %v1549
      %v1551 = vpop.f32.mrf.mxu0
      %v1552 = vpop.f32.mrf.mxu0
      %v1553 = vadd.f32 %v1344, %v1552
      %v1554 = vpop.f32.mrf.mxu0
      %1555 = vmatprep.mubr.bf16.mxu0 0
      %1556 = vmatmul.mubr.bf16.gmra.mxu0 %v1393
      %v1557 = vpop.f32.mrf.mxu0
      %v1558 = vadd.f32 %v1344, %v1557
      %v1559 = vpop.f32.mrf.mxu0
      %v1560 = vpop.f32.mrf.mxu0
      %v1561 = vadd.f32 %v1344, %v1560
      %v1562 = vpop.f32.mrf.mxu0
      %1563 = vmatprep.mubr.bf16.mxu0 0
      %1564 = vmatmul.mubr.bf16.gmra.mxu0 %v1396
      %v1565 = vpop.f32.mrf.mxu0
      %v1566 = vadd.f32 %v1344, %v1565
      %v1567 = vpop.f32.mrf.mxu0
      %v1568 = vpop.f32.mrf.mxu0
      %v1569 = vadd.f32 %v1344, %v1568
      %v1570 = vpop.f32.mrf.mxu0
      %1571 = vmatprep.mubr.bf16.mxu0 0
      %1572 = vmatmul.mubr.bf16.gmra.mxu0 %v1399
      %v1573 = vpop.f32.mrf.mxu0
      %v1574 = vadd.f32 %v1344, %v1573
      %v1575 = vpop.f32.mrf.mxu0
      %v1576 = vpop.f32.mrf.mxu0
      %v1577 = vadd.f32 %v1344, %v1576
      %v1578 = vpop.f32.mrf.mxu0
      %1579 = vmatprep.mubr.bf16.mxu0 0
      %1580 = vmatmul.mubr.bf16.gmra.mxu0 %v1402
      %v1581 = vpop.f32.mrf.mxu0
      %v1582 = vadd.f32 %v1344, %v1581
      %v1583 = vpop.f32.mrf.mxu0
      %v1584 = vpop.f32.mrf.mxu0
      %v1585 = vadd.f32 %v1344, %v1584
      %v1586 = vpop.f32.mrf.mxu0
      %1587 = vmatprep.mubr.bf16.mxu0 0
      %1588 = vmatmul.mubr.bf16.gmra.mxu0 %v1405
      %v1589 = vpop.f32.mrf.mxu0
      %v1590 = vadd.f32 %v1344, %v1589
      %v1591 = vpop.f32.mrf.mxu0
      %v1592 = vpop.f32.mrf.mxu0
      %v1593 = vadd.f32 %v1344, %v1592
      %v1594 = vpop.f32.mrf.mxu0
      %1595 = vmatprep.mubr.bf16.mxu0 0
      %1596 = vmatmul.mubr.bf16.gmra.mxu0 %v1408
      %v1597 = vpop.f32.mrf.mxu0
      %v1598 = vadd.f32 %v1344, %v1597
      %v1599 = vpop.f32.mrf.mxu0
      %v1600 = vpop.f32.mrf.mxu0
      %v1601 = vadd.f32 %v1344, %v1600
      %v1602 = vpop.f32.mrf.mxu0
      %1603 = vmatprep.mubr.bf16.mxu0 0
      %1604 = vmatmul.mubr.bf16.gmra.mxu0 %v1411
      %v1605 = vpop.f32.mrf.mxu0
      %v1606 = vadd.f32 %v1344, %v1605
      %v1607 = vpop.f32.mrf.mxu0
      %v1608 = vpop.f32.mrf.mxu0
      %v1609 = vadd.f32 %v1344, %v1608
      %v1610 = vpop.f32.mrf.mxu0
      %1611 = vmatprep.mubr.bf16.mxu0 0
      %1612 = vmatmul.mubr.bf16.gmra.mxu0 %v1414
      %v1613 = vpop.f32.mrf.mxu0
      %v1614 = vadd.f32 %v1344, %v1613
      %v1615 = vpop.f32.mrf.mxu0
      %v1616 = vpop.f32.mrf.mxu0
      %v1617 = vadd.f32 %v1344, %v1616
      %v1618 = vpop.f32.mrf.mxu0
      %1619 = vmatprep.mubr.bf16.mxu0 0
      %1620 = vmatmul.mubr.bf16.gmra.mxu0 %v1417
      %v1621 = vpop.f32.mrf.mxu0
      %v1622 = vadd.f32 %v1344, %v1621
      %v1623 = vpop.f32.mrf.mxu0
      %v1624 = vpop.f32.mrf.mxu0
      %v1625 = vadd.f32 %v1344, %v1624
      %v1626 = vpop.f32.mrf.mxu0
      %1627 = vmatprep.mubr.bf16.mxu0 0
      %1628 = vmatmul.mubr.bf16.gmra.mxu0 %v1420
      %v1629 = vpop.f32.mrf.mxu0
      %v1630 = vadd.f32 %v1344, %v1629
      %v1631 = vpop.f32.mrf.mxu0
      %v1632 = vpop.f32.mrf.mxu0
      %v1633 = vadd.f32 %v1344, %v1632
      %v1634 = vpop.f32.mrf.mxu0
      %1635 = vmatprep.mubr.bf16.mxu0 0
      %1636 = vmatmul.mubr.bf16.gmra.mxu0 %v1423
      %v1637 = vpop.f32.mrf.mxu0
      %v1638 = vadd.f32 %v1344, %v1637
      %v1639 = vpop.f32.mrf.mxu0
      %v1640 = vpop.f32.mrf.mxu0
      %v1641 = vadd.f32 %v1344, %v1640
      %v1642 = vpop.f32.mrf.mxu0
      %1643 = vmatprep.mubr.bf16.mxu0 0
      %1644 = vmatmul.mubr.bf16.gmra.mxu0 %v1426
      %v1645 = vpop.f32.mrf.mxu0
      %v1646 = vadd.f32 %v1344, %v1645
      %v1647 = vpop.f32.mrf.mxu0
      %v1648 = vpop.f32.mrf.mxu0
      %v1649 = vadd.f32 %v1344, %v1648
      %v1650 = vpop.f32.mrf.mxu0
      %1651 = vmatprep.mubr.bf16.mxu0 0
      %1652 = vmatmul.mubr.bf16.gmra.mxu0 %v1429
      %v1653 = vpop.f32.mrf.mxu0
      %v1654 = vadd.f32 %v1344, %v1653
      %v1655 = vpop.f32.mrf.mxu0
      %v1656 = vpop.f32.mrf.mxu0
      %v1657 = vadd.f32 %v1344, %v1656
      %v1658 = vpop.f32.mrf.mxu0
      %1659 = vmatprep.mubr.bf16.mxu0 0
      %1660 = vmatmul.mubr.bf16.gmra.mxu0 %v1432
      %v1661 = vpop.f32.mrf.mxu0
      %v1662 = vadd.f32 %v1344, %v1661
      %v1663 = vpop.f32.mrf.mxu0
      %v1664 = vpop.f32.mrf.mxu0
      %v1665 = vadd.f32 %v1344, %v1664
      %v1666 = vpop.f32.mrf.mxu0
      %1667 = vmatprep.mubr.bf16.mxu0 0
      %1668 = vmatmul.mubr.bf16.gmra.mxu0 %v1435
      %v1669 = vpop.f32.mrf.mxu0
      %v1670 = vadd.f32 %v1344, %v1669
      %v1671 = vpop.f32.mrf.mxu0
      %v1672 = vpop.f32.mrf.mxu0
      %v1673 = vadd.f32 %v1344, %v1672
      %v1674 = vpop.f32.mrf.mxu0
      %1675 = vmatprep.mubr.bf16.mxu0 0
      %1676 = vmatmul.mubr.bf16.gmra.mxu0 %v1438
      %v1677 = vpop.f32.mrf.mxu0
      %v1678 = vadd.f32 %v1344, %v1677
      %v1679 = vpop.f32.mrf.mxu0
      %v1680 = vpop.f32.mrf.mxu0
      %v1681 = vadd.f32 %v1344, %v1680
      %v1682 = vpop.f32.mrf.mxu0
      %1683 = vmatprep.mubr.bf16.mxu0 0
      %1684 = vmatmul.mubr.bf16.gmra.mxu0 %v1441
      %v1685 = vpop.f32.mrf.mxu0
      %v1686 = vadd.f32 %v1344, %v1685
      %v1687 = vpop.f32.mrf.mxu0
      %v1688 = vpop.f32.mrf.mxu0
      %v1689 = vadd.f32 %v1344, %v1688
      %v1690 = vpop.f32.mrf.mxu0
      %1691 = vmatprep.mubr.bf16.mxu0 0
      %1692 = vmatmul.mubr.bf16.gmra.mxu0 %v1444
      %v1693 = vpop.f32.mrf.mxu0
      %v1694 = vadd.f32 %v1344, %v1693
      %v1695 = vpop.f32.mrf.mxu0
      %v1696 = vpop.f32.mrf.mxu0
      %v1697 = vadd.f32 %v1344, %v1696
      %v1698 = vpop.f32.mrf.mxu0
      %1699 = vmatprep.mubr.bf16.mxu0 0
      %1700 = vmatmul.mubr.bf16.gmra.mxu0 %v1447
      %v1701 = vpop.f32.mrf.mxu0
      %v1702 = vadd.f32 %v1344, %v1701
      %v1703 = vpop.f32.mrf.mxu0
      %v1704 = vpop.f32.mrf.mxu0
      %v1705 = vadd.f32 %v1344, %v1704
      %v1706 = vpop.f32.mrf.mxu0
      %1707 = vmatprep.mubr.bf16.mxu0 0
      %1708 = vmatmul.mubr.bf16.gmra.mxu0 %v1450
      %v1709 = vpop.f32.mrf.mxu0
      %v1710 = vadd.f32 %v1344, %v1709
      %v1711 = vpop.f32.mrf.mxu0
      %v1712 = vpop.f32.mrf.mxu0
      %v1713 = vadd.f32 %v1344, %v1712
      %v1714 = vpop.f32.mrf.mxu0
      %1715 = vmatprep.mubr.bf16.mxu0 0
      %1716 = vmatmul.mubr.bf16.gmra.mxu0 %v1453
      %v1717 = vpop.f32.mrf.mxu0
      %v1718 = vadd.f32 %v1344, %v1717
      %v1719 = vpop.f32.mrf.mxu0
      %v1720 = vpop.f32.mrf.mxu0
      %v1721 = vadd.f32 %v1344, %v1720
      %v1722 = vpop.f32.mrf.mxu0
      %1723 = vmatprep.mubr.bf16.mxu0 0
      %1724 = vmatmul.mubr.bf16.gmra.mxu0 %v1456
      %v1725 = vpop.f32.mrf.mxu0
      %v1726 = vadd.f32 %v1344, %v1725
      %v1727 = vpop.f32.mrf.mxu0
      %v1728 = vpop.f32.mrf.mxu0
      %v1729 = vadd.f32 %v1344, %v1728
      %v1730 = vpop.f32.mrf.mxu0
      %1731 = vmatprep.mubr.bf16.mxu0 0
      %1732 = vmatmul.mubr.bf16.gmra.mxu0 %v1459
      %v1733 = vpop.f32.mrf.mxu0
      %v1734 = vadd.f32 %v1344, %v1733
      %v1735 = vpop.f32.mrf.mxu0
      %v1736 = vpop.f32.mrf.mxu0
      %v1737 = vadd.f32 %v1344, %v1736
      %v1738 = vpop.f32.mrf.mxu0
      %1739 = vmatprep.mubr.bf16.mxu0 0
      %1740 = vmatmul.mubr.bf16.gmra.mxu0 %v1462
      %v1741 = vpop.f32.mrf.mxu0
      %v1742 = vadd.f32 %v1344, %v1741
      %v1743 = vpop.f32.mrf.mxu0
      %v1744 = vpop.f32.mrf.mxu0
      %v1745 = vadd.f32 %v1344, %v1744
      %v1746 = vpop.f32.mrf.mxu0
      %1747 = vmatprep.mubr.bf16.mxu0 0
      %1748 = vmatmul.mubr.bf16.gmra.mxu0 %v1465
      %v1749 = vpop.f32.mrf.mxu0
      %v1750 = vadd.f32 %v1344, %v1749
      %v1751 = vpop.f32.mrf.mxu0
      %v1752 = vpop.f32.mrf.mxu0
      %v1753 = vadd.f32 %v1344, %v1752
      %v1754 = vpop.f32.mrf.mxu0
      %1755 = vdwg.mxu0
      %vm1756 = vcmask 261120
      %1757 = vst.msk [vmem:[%s226] sm:$0xff] %vm1756, %v1502
      %1758 = vst.msk [vmem:[%s226 + $0x8] sm:$0xff] %vm1756, %v1505
      %1759 = vst.msk [vmem:[%s226 + $0x10] sm:$0xff] %vm1756, %v1510
      %1760 = vst.msk [vmem:[%s226 + $0x18] sm:$0xff] %vm1756, %v1513
      %1761 = vst.msk [vmem:[%s226 + $0x20] sm:$0xff] %vm1756, %v1518
      %1762 = vst.msk [vmem:[%s226 + $0x28] sm:$0xff] %vm1756, %v1521
      %1763 = vst.msk [vmem:[%s226 + $0x30] sm:$0xff] %vm1756, %v1526
      %1764 = vst.msk [vmem:[%s226 + $0x38] sm:$0xff] %vm1756, %v1529
      %1765 = vst.msk [vmem:[%s226 + $0x40] sm:$0xff] %vm1756, %v1534
      %1766 = vst.msk [vmem:[%s226 + $0x48] sm:$0xff] %vm1756, %v1537
      %1767 = vst.msk [vmem:[%s226 + $0x50] sm:$0xff] %vm1756, %v1542
      %1768 = vst.msk [vmem:[%s226 + $0x58] sm:$0xff] %vm1756, %v1545
      %1769 = vst.msk [vmem:[%s226 + $0x60] sm:$0xff] %vm1756, %v1550
      %1770 = vst.msk [vmem:[%s226 + $0x68] sm:$0xff] %vm1756, %v1553
      %1771 = vst.msk [vmem:[%s226 + $0x70] sm:$0xff] %vm1756, %v1558
      %1772 = vst.msk [vmem:[%s226 + $0x78] sm:$0xff] %vm1756, %v1561
      %1773 = vst.msk [vmem:[%s226 + $0x80] sm:$0xff] %vm1756, %v1566
      %1774 = vst.msk [vmem:[%s226 + $0x88] sm:$0xff] %vm1756, %v1569
      %1775 = vst.msk [vmem:[%s226 + $0x90] sm:$0xff] %vm1756, %v1574
      %1776 = vst.msk [vmem:[%s226 + $0x98] sm:$0xff] %vm1756, %v1577
      %1777 = vst.msk [vmem:[%s226 + $0xa0] sm:$0xff] %vm1756, %v1582
      %1778 = vst.msk [vmem:[%s226 + $0xa8] sm:$0xff] %vm1756, %v1585
      %1779 = vst.msk [vmem:[%s226 + $0xb0] sm:$0xff] %vm1756, %v1590
      %1780 = vst.msk [vmem:[%s226 + $0xb8] sm:$0xff] %vm1756, %v1593
      %1781 = vst.msk [vmem:[%s226 + $0xc0] sm:$0xff] %vm1756, %v1598
      %1782 = vst.msk [vmem:[%s226 + $0xc8] sm:$0xff] %vm1756, %v1601
      %1783 = vst.msk [vmem:[%s226 + $0xd0] sm:$0xff] %vm1756, %v1606
      %1784 = vst.msk [vmem:[%s226 + $0xd8] sm:$0xff] %vm1756, %v1609
      %1785 = vst.msk [vmem:[%s226 + $0xe0] sm:$0xff] %vm1756, %v1614
      %1786 = vst.msk [vmem:[%s226 + $0xe8] sm:$0xff] %vm1756, %v1617
      %1787 = vst.msk [vmem:[%s226 + $0xf0] sm:$0xff] %vm1756, %v1622
      %1788 = vst.msk [vmem:[%s226 + $0xf8] sm:$0xff] %vm1756, %v1625
      %1789 = vst.msk [vmem:[%s226 + $0x100] sm:$0xff] %vm1756, %v1630
      %1790 = vst.msk [vmem:[%s226 + $0x108] sm:$0xff] %vm1756, %v1633
      %1791 = vst.msk [vmem:[%s226 + $0x110] sm:$0xff] %vm1756, %v1638
      %1792 = vst.msk [vmem:[%s226 + $0x118] sm:$0xff] %vm1756, %v1641
      %1793 = vst.msk [vmem:[%s226 + $0x120] sm:$0xff] %vm1756, %v1646
      %1794 = vst.msk [vmem:[%s226 + $0x128] sm:$0xff] %vm1756, %v1649
      %1795 = vst.msk [vmem:[%s226 + $0x130] sm:$0xff] %vm1756, %v1654
      %1796 = vst.msk [vmem:[%s226 + $0x138] sm:$0xff] %vm1756, %v1657
      %1797 = vst.msk [vmem:[%s226 + $0x140] sm:$0xff] %vm1756, %v1662
      %1798 = vst.msk [vmem:[%s226 + $0x148] sm:$0xff] %vm1756, %v1665
      %1799 = vst.msk [vmem:[%s226 + $0x150] sm:$0xff] %vm1756, %v1670
      %1800 = vst.msk [vmem:[%s226 + $0x158] sm:$0xff] %vm1756, %v1673
      %1801 = vst.msk [vmem:[%s226 + $0x160] sm:$0xff] %vm1756, %v1678
      %1802 = vst.msk [vmem:[%s226 + $0x168] sm:$0xff] %vm1756, %v1681
      %1803 = vst.msk [vmem:[%s226 + $0x170] sm:$0xff] %vm1756, %v1686
      %1804 = vst.msk [vmem:[%s226 + $0x178] sm:$0xff] %vm1756, %v1689
      %1805 = vst.msk [vmem:[%s226 + $0x180] sm:$0xff] %vm1756, %v1694
      %1806 = vst.msk [vmem:[%s226 + $0x188] sm:$0xff] %vm1756, %v1697
      %1807 = vst.msk [vmem:[%s226 + $0x190] sm:$0xff] %vm1756, %v1702
      %1808 = vst.msk [vmem:[%s226 + $0x198] sm:$0xff] %vm1756, %v1705
      %1809 = vst.msk [vmem:[%s226 + $0x1a0] sm:$0xff] %vm1756, %v1710
      %1810 = vst.msk [vmem:[%s226 + $0x1a8] sm:$0xff] %vm1756, %v1713
      %1811 = vst.msk [vmem:[%s226 + $0x1b0] sm:$0xff] %vm1756, %v1718
      %1812 = vst.msk [vmem:[%s226 + $0x1b8] sm:$0xff] %vm1756, %v1721
      %1813 = vst.msk [vmem:[%s226 + $0x1c0] sm:$0xff] %vm1756, %v1726
      %1814 = vst.msk [vmem:[%s226 + $0x1c8] sm:$0xff] %vm1756, %v1729
      %1815 = vst.msk [vmem:[%s226 + $0x1d0] sm:$0xff] %vm1756, %v1734
      %1816 = vst.msk [vmem:[%s226 + $0x1d8] sm:$0xff] %vm1756, %v1737
      %1817 = vst.msk [vmem:[%s226 + $0x1e0] sm:$0xff] %vm1756, %v1742
      %1818 = vst.msk [vmem:[%s226 + $0x1e8] sm:$0xff] %vm1756, %v1745
      %1819 = vst.msk [vmem:[%s226 + $0x1f0] sm:$0xff] %vm1756, %v1750
      %1820 = vst.msk [vmem:[%s226 + $0x1f8] sm:$0xff] %vm1756, %v1753
      %s1821 = smul.u32 64, %s16
      %p1822 = scmp.lt.s32.totalorder %s1821, 127
      %s1823 = scalar_select %p1822, %s1821, 127
      %s1824 = smul.addr %s1823, 8
      %s1825 = scalar_lea.vmem %s5, %s1824
      // Predicated region
      $region41: #{tpu_custom_call.1} parent=39 // pred_check
        %p1826 = pneg %p144
      $region42: #{tpu_custom_call.1} parent=39 // pred_check_branch
        %1828 = sbr.rel (%p1826) target = $region44
      $region43: #{tpu_custom_call.1} parent=39 // pred_region
        %s1829 = smul.u32 64, %s16
      $region44: #{tpu_custom_call.1} parent=39 // pred_fallthru
        _
    $region40: #{tpu_custom_call.1} parent=5 // pred_fallthru
      _
    %p1830 = scmp.le.s32.totalorder 2, %s11
    // Predicated region
    $region45: #{tpu_custom_call.1} parent=5 // pred_check
      %p1831 = pneg %p1830
    $region46: #{tpu_custom_call.1} parent=5 // pred_check_branch
      %1833 = sbr.rel (%p1831) target = $region48
    $region47: #{tpu_custom_call.1} parent=5 // pred_region
      %s1834 = ssub.s32 %s11, 2
      // Predicated region
      $region49: #{tpu_custom_call.1} parent=47 // pred_check
        %p1835 = pneg %p150
      $region50: #{tpu_custom_call.1} parent=47 // pred_check_branch
        %1837 = sbr.rel (%p1835) target = $region52
      $region51: #{tpu_custom_call.1} parent=47 // pred_region
        %s1838 = smul.u32 64, %s17
        %p1839 = scmp.lt.s32.totalorder %s1838, 127
        %s1840 = scalar_select %p1839, %s1838, 127
        %s1841 = smul.addr %s1840, 8
        %s1842 = scalar_lea.vmem %s5, %s1841
      $region52: #{tpu_custom_call.1} parent=47 // pred_fallthru
        _
    $region48: #{tpu_custom_call.1} parent=5 // pred_fallthru
      _
  $region6: #{tpu_custom_call.1} parent=0 // loop_footer
    %s15 = sadd.s32 1, %s11
  $region7: #{tpu_custom_call.1} parent=0 // loop_footer_branch
    %10 = sbr.rel target = $region3
  $region8: #{tpu_custom_call.1} parent=0 // loop_exit
    _

</llo_original>
